<compile_context>
chip_gen: v5e
topology: v5e:2x2
jax: 0.10.0
libtpu: 0.0.40
codegen_flags: <defaults>
</compile_context>

<pallas_src>
import functools

import jax
import jax.numpy as jnp
from jax.experimental import pallas as pl
from jax.experimental.pallas import tpu as pltpu


def _round_up(x: int, m: int) -> int:
    return (x + m - 1) // m * m


def _device_kind() -> str:
    try:
        return jax.devices()[0].device_kind.lower()
    except Exception:
        return ""


def gated_attention_kernel(x_ref, wab_ref, bab_ref, wc_ref, bc_ref, out_ref, *, act_dtype):
    """One N-tile: fused Linear(a|b) + tanh/sigmoid gate + Linear(c).

    Shapes (per grid step):
      x_ref   : (TILE_N, D)
      wab_ref : (D, 2*Hp)     packed [Wa | Wb], Hp = H padded to a multiple of 128
      bab_ref : (1, 2*Hp)     packed [ba | bb]
      wc_ref  : (Hp, C)       natural layout (padded H rows are zero)
      bc_ref  : (1, C)
      out_ref : (TILE_N, C)   f32
    """
    hp = wab_ref.shape[1] // 2

    # Single MXU pass over the x tile for both gate branches; f32 accumulation.
    ab = jnp.dot(x_ref[...], wab_ref[...], preferred_element_type=jnp.float32)
    ab = (ab + bab_ref[...]).astype(act_dtype)

    half = jnp.asarray(0.5, act_dtype)
    one = jnp.asarray(1.0, act_dtype)

    # Column split is lane-tile aligned because Hp % 128 == 0.
    a = jnp.tanh(ab[:, :hp])                              # EUP
    # sigmoid(v) == 0.5*(1 + tanh(0.5*v)): one EUP push instead of exp + divide.
    b = half * (one + jnp.tanh(half * ab[:, hp:]))        # EUP + VPU
    gated = (a * b).astype(wc_ref.dtype)                  # VPU

    # Natural-layout final projection: (TILE_N, Hp) x (Hp, C) -> (TILE_N, C).
    scores = jnp.dot(gated, wc_ref[...], preferred_element_type=jnp.float32)
    out_ref[...] = (scores + bc_ref[...]).astype(out_ref.dtype)


@functools.partial(
    jax.jit,
    static_argnames=("tile_n", "act_dtype", "x_buffers", "use_pipeline_mode"),
)
def _gated_attention_impl(x, wab, bab, wc, bc, *, tile_n, act_dtype, x_buffers,
                          use_pipeline_mode):
    n, d = x.shape
    h2 = wab.shape[1]
    hp = h2 // 2
    c = wc.shape[1]

    # Tile over N (lane-aligned).  Keep >= 2 grid steps when possible so the
    # "parallel" axis can split across TensorCores (v7x) and the pipeline overlaps.
    n128 = _round_up(max(n, 1), 128)
    tn = max(128, min(_round_up(tile_n, 128), n128))
    if n128 >= 256 and n128 // tn < 2:
        tn = _round_up(pl.cdiv(n128, 2), 128)
    n_pad = _round_up(max(n, 1), tn)
    grid = (n_pad // tn,)

    x_p = jnp.pad(x, ((0, n_pad - n), (0, 0))) if n_pad != n else x

    x_item = jnp.dtype(x.dtype).itemsize
    w_item = jnp.dtype(wab.dtype).itemsize
    act_item = jnp.dtype(act_dtype).itemsize
    w_bufs = 1 if use_pipeline_mode else 2

    # VMEM budget: x / out tiles (buffered), resident weights, f32/act intermediates.
    vmem_est = (
        max(2, x_buffers) * tn * d * x_item
        + 2 * tn * c * 4
        + w_bufs * (d * h2 + h2 + hp * c + c) * w_item
        + tn * h2 * 4                 # ab (f32)
        + 3 * tn * hp * act_item      # a / b / gated
        + (4 << 20)                   # Mosaic internal-scratch slack
    )
    try:
        vmem_cap = int(pltpu.get_tpu_info().vmem_capacity_bytes)
    except Exception:
        vmem_cap = 64 << 20           # conservative default (v7x per-TC VMEM)
    vmem_limit = int(min(max(vmem_est, 16 << 20), int(0.75 * vmem_cap)))

    cost = pl.CostEstimate(
        flops=2 * n_pad * d * h2 + 2 * n_pad * hp * c + n_pad * hp,
        transcendentals=2 * n_pad * hp,
        bytes_accessed=n_pad * d * x_item
        + (d * h2 + h2 + hp * c + c) * w_item
        + n_pad * c * 4,
    )

    # Grid-invariant weights: single-buffer when the installed JAX supports it.
    def _wspec(shape):
        if use_pipeline_mode:
            return pl.BlockSpec(shape, lambda i: (0, 0), pipeline_mode=pl.Buffered(1))
        return pl.BlockSpec(shape, lambda i: (0, 0))

    if use_pipeline_mode and x_buffers != 2:
        x_spec = pl.BlockSpec((tn, d), lambda i: (i, 0),
                              pipeline_mode=pl.Buffered(x_buffers))
    else:
        x_spec = pl.BlockSpec((tn, d), lambda i: (i, 0))

    out = pl.pallas_call(
        functools.partial(gated_attention_kernel, act_dtype=act_dtype),
        out_shape=jax.ShapeDtypeStruct((n_pad, c), jnp.float32),
        grid_spec=pltpu.PrefetchScalarGridSpec(
            num_scalar_prefetch=0,
            grid=grid,
            in_specs=[
                x_spec,                 # x tile
                _wspec((d, h2)),        # [Wa | Wb]
                _wspec((1, h2)),        # [ba | bb]
                _wspec((hp, c)),        # Wc (natural layout)
                _wspec((1, c)),         # bc
            ],
            out_specs=pl.BlockSpec((tn, c), lambda i: (i, 0)),
        ),
        compiler_params=pltpu.CompilerParams(
            dimension_semantics=("parallel",),
            vmem_limit_bytes=vmem_limit,
        ),
        cost_estimate=cost,
    )(x_p, wab, bab, wc, bc)

    return out[:n]


_PIPELINE_MODE_OK = None  # one-time probe: does BlockSpec accept pipeline_mode here?


def gated_attention(x, wab, bab, wc, bc, *, tile_n=1024, act_dtype=None, x_buffers=None):
    """x: (N, D). Packed params from `pack_params`. Returns (A, x); A is (N, C) f32."""
    global _PIPELINE_MODE_OK
    kind = _device_kind()
    if act_dtype is None:
        # v6e / v7x have bf16 EUP/VPU paths; older generations would only add converts.
        act_dtype = jnp.bfloat16 if ("v6" in kind or "v7" in kind) else jnp.float32
    if x_buffers is None:
        # Deeper x buffering hides the slower HBM on v5-class chips.
        x_buffers = 3 if any(v in kind for v in ("v5", "v4", "v3", "v2")) else 2

    kwargs = dict(tile_n=tile_n, act_dtype=act_dtype, x_buffers=x_buffers)
    if _PIPELINE_MODE_OK is None:
        try:
            A = _gated_attention_impl(x, wab, bab, wc, bc,
                                      use_pipeline_mode=True, **kwargs)
            jax.block_until_ready(A)
            _PIPELINE_MODE_OK = True
            return A, x
        except Exception:
            _PIPELINE_MODE_OK = False
    A = _gated_attention_impl(x, wab, bab, wc, bc,
                              use_pipeline_mode=_PIPELINE_MODE_OK, **kwargs)
    return A, x


def pack_params(wa, ba, wb, bb, wc, bc, *, dtype=None):
    """Pack PyTorch-layout params for the kernel.

    Inputs (already transposed to (in, out) layout):
      wa, wb: (D, H); ba, bb: (1, H); wc: (H, C); bc: (1, C)
    Returns:
      wab (D, 2*Hp), bab (1, 2*Hp), wc_p (Hp, C), bc2 (1, C)
    with H padded to a multiple of 128 (padded Wc rows are zero, so padded hidden
    columns contribute nothing).  Optionally casts all params to `dtype` (e.g. bf16
    streaming on v5e).
    """
    d, h = wa.shape
    c = wc.shape[1]
    hp = max(128, _round_up(h, 128))
    ph = hp - h

    if dtype is not None:
        wa, ba, wb, bb, wc, bc = (t.astype(dtype) for t in (wa, ba, wb, bb, wc, bc))

    wa_p = jnp.pad(wa, ((0, 0), (0, ph)))
    wb_p = jnp.pad(wb, ((0, 0), (0, ph)))
    ba_p = jnp.pad(ba.reshape(1, h), ((0, 0), (0, ph)))
    bb_p = jnp.pad(bb.reshape(1, h), ((0, 0), (0, ph)))
    wc_p = jnp.pad(wc, ((0, ph), (0, 0)))              # (Hp, C)

    wab = jnp.concatenate([wa_p, wb_p], axis=1)        # (D, 2*Hp)
    bab = jnp.concatenate([ba_p, bb_p], axis=1)        # (1, 2*Hp)
    bc2 = bc.reshape(1, c)                             # (1, C)
    return wab, bab, wc_p, bc2


def init_params(key, input_dim, hidden_dim, n_classes, dtype=jnp.float32):
    """PyTorch-like uniform(+-1/sqrt(fan_in)) init, weights as (in, out)."""
    ks = jax.random.split(key, 6)
    bound_a = 1.0 / (input_dim ** 0.5)
    bound_c = 1.0 / (hidden_dim ** 0.5)
    wa = jax.random.uniform(ks[0], (input_dim, hidden_dim), dtype, -bound_a, bound_a)
    ba = jax.random.uniform(ks[1], (1, hidden_dim), dtype, -bound_a, bound_a)
    wb = jax.random.uniform(ks[2], (input_dim, hidden_dim), dtype, -bound_a, bound_a)
    bb = jax.random.uniform(ks[3], (1, hidden_dim), dtype, -bound_a, bound_a)
    wc = jax.random.uniform(ks[4], (hidden_dim, n_classes), dtype, -bound_c, bound_c)
    bc = jax.random.uniform(ks[5], (1, n_classes), dtype, -bound_c, bound_c)
    return wa, ba, wb, bb, wc, bc


def reference(x, wa, ba, wb, bb, wc, bc):
    a = jnp.tanh(x @ wa + ba)
    b = jax.nn.sigmoid(x @ wb + bb)
    return (a * b) @ wc + bc


if __name__ == "__main__":
    # Small shapes consistent with the module (x is (batch, input_dim)); large
    # enough to exercise a multi-step grid and lane-aligned tiles.
    N, INPUT_DIM, HIDDEN_DIM, N_CLASSES = 256, 128, 128, 1

    key = jax.random.PRNGKey(0)
    kx, kp = jax.random.split(key)
    x = jax.random.normal(kx, (N, INPUT_DIM), dtype=jnp.float32)
    raw_params = init_params(kp, INPUT_DIM, HIDDEN_DIM, N_CLASSES)

    kind = _device_kind()
    # Generation-aware choices (perf review): bf16 x/weight streaming on v5-class
    # chips; bf16 activations on v6e/v7x.  f32 otherwise.
    stream_bf16 = any(v in kind for v in ("v5", "v4", "v3", "v2"))
    act_bf16 = ("v6" in kind) or ("v7" in kind)

    packed = pack_params(*raw_params, dtype=jnp.bfloat16 if stream_bf16 else None)
    x_in = x.astype(jnp.bfloat16) if stream_bf16 else x

    bf16_path = stream_bf16 or act_bf16
    atol = 5e-2 if bf16_path else 1e-5
    rtol = 5e-2 if bf16_path else 1e-5

    A, x_out = gated_attention(x_in, *packed)
    A = jax.block_until_ready(A)
    x_out = jax.block_until_ready(x_out)

    # Sanity check against a plain-JAX reference (unpacked f32 params).
    A_ref = reference(x_in.astype(jnp.float32), *raw_params)
    assert A.shape == (N, N_CLASSES), A.shape
    assert A.dtype == jnp.float32, A.dtype
    assert x_out.shape == x_in.shape
    assert jnp.allclose(A, A_ref, atol=atol, rtol=rtol), float(
        jnp.max(jnp.abs(A - A_ref)))
    assert jnp.array_equal(x_out, x_in)

    # Also exercise a non-tile-multiple N to check the padding / tile-clamp path.
    N2 = 200
    x2 = jax.random.normal(jax.random.PRNGKey(1), (N2, INPUT_DIM), jnp.float32)
    x2_in = x2.astype(jnp.bfloat16) if stream_bf16 else x2
    A2, _ = gated_attention(x2_in, *packed)
    A2 = jax.block_until_ready(A2)
    assert A2.shape == (N2, N_CLASSES)
    A2_ref = reference(x2_in.astype(jnp.float32), *raw_params)
    assert jnp.allclose(A2, A2_ref, atol=atol, rtol=rtol), float(
        jnp.max(jnp.abs(A2 - A2_ref)))

    print("KERNEL_OK")
</pallas_src>

<mosaic_0001>
module attributes {stable_mosaic.version = 11 : i64} {
  func.func @gated_attention_kernel(%arg0: i32, %arg1: memref<128x128xf32, #tpu.memory_space<vmem>>, %arg2: memref<128x256xf32, #tpu.memory_space<vmem>>, %arg3: memref<1x256xf32, #tpu.memory_space<vmem>>, %arg4: memref<128x1xf32, #tpu.memory_space<vmem>>, %arg5: memref<1x1xf32, #tpu.memory_space<vmem>>, %arg6: memref<128x1xf32, #tpu.memory_space<vmem>>) attributes {dimension_semantics = [#tpu.dimension_semantics<parallel>], iteration_bounds = array<i64: 2>, scalar_prefetch = 0 : i64, scratch_operands = 0 : i64, tpu.core_type = #tpu.core_type<tc>, window_params = [{transform_indices = @transform_0, window_bounds = array<i64: 128, 128>}, {pipeline_mode = #tpu.pipeline_mode<synchronous>, transform_indices = @transform_1, window_bounds = array<i64: 128, 256>}, {pipeline_mode = #tpu.pipeline_mode<synchronous>, transform_indices = @transform_2, window_bounds = array<i64: 1, 256>}, {pipeline_mode = #tpu.pipeline_mode<synchronous>, transform_indices = @transform_3, window_bounds = array<i64: 128, 1>}, {pipeline_mode = #tpu.pipeline_mode<synchronous>, transform_indices = @transform_4, window_bounds = array<i64: 1, 1>}, {transform_indices = @transform_5, window_bounds = array<i64: 128, 1>}]} {
    %c0 = arith.constant 0 : index
    %c0_0 = arith.constant 0 : index
    %0 = vector.load %arg1[%c0, %c0_0] : memref<128x128xf32, #tpu.memory_space<vmem>>, vector<128x128xf32>
    %c0_1 = arith.constant 0 : index
    %c0_2 = arith.constant 0 : index
    %1 = vector.load %arg2[%c0_1, %c0_2] : memref<128x256xf32, #tpu.memory_space<vmem>>, vector<128x256xf32>
    %cst = arith.constant dense<0.000000e+00> : vector<128x256xf32>
    %2 = tpu.matmul %0, %1, %cst {dimension_numbers = #tpu.dot_dimension_numbers<[1], [0], [0], [1], [0, 0, 1, 1], [], []>} : vector<128x128xf32>, vector<128x256xf32>, vector<128x256xf32> -> vector<128x256xf32>
    %c0_3 = arith.constant 0 : index
    %c0_4 = arith.constant 0 : index
    %3 = vector.load %arg3[%c0_3, %c0_4] : memref<1x256xf32, #tpu.memory_space<vmem>>, vector<1x256xf32>
    %4 = vector.broadcast %3 : vector<1x256xf32> to vector<128x256xf32>
    %5 = arith.addf %2, %4 : vector<128x256xf32>
    %6 = vector.extract_strided_slice %5 {offsets = [0, 0], sizes = [128, 128], strides = [1, 1]} : vector<128x256xf32> to vector<128x128xf32>
    %7 = math.tanh %6 : vector<128x128xf32>
    %8 = vector.extract_strided_slice %5 {offsets = [0, 128], sizes = [128, 128], strides = [1, 1]} : vector<128x256xf32> to vector<128x128xf32>
    %cst_5 = arith.constant 5.000000e-01 : f32
    %9 = vector.broadcast %cst_5 : f32 to vector<128x128xf32>
    %10 = arith.mulf %9, %8 : vector<128x128xf32>
    %11 = math.tanh %10 : vector<128x128xf32>
    %cst_6 = arith.constant 1.000000e+00 : f32
    %12 = vector.broadcast %cst_6 : f32 to vector<128x128xf32>
    %13 = arith.addf %12, %11 : vector<128x128xf32>
    %cst_7 = arith.constant 5.000000e-01 : f32
    %14 = vector.broadcast %cst_7 : f32 to vector<128x128xf32>
    %15 = arith.mulf %14, %13 : vector<128x128xf32>
    %16 = arith.mulf %7, %15 : vector<128x128xf32>
    %c0_8 = arith.constant 0 : index
    %c0_9 = arith.constant 0 : index
    %17 = vector.load %arg4[%c0_8, %c0_9] : memref<128x1xf32, #tpu.memory_space<vmem>>, vector<128x1xf32>
    %cst_10 = arith.constant dense<0.000000e+00> : vector<128x1xf32>
    %18 = tpu.matmul %16, %17, %cst_10 {dimension_numbers = #tpu.dot_dimension_numbers<[1], [0], [0], [1], [0, 0, 1, 1], [], []>} : vector<128x128xf32>, vector<128x1xf32>, vector<128x1xf32> -> vector<128x1xf32>
    %c0_11 = arith.constant 0 : index
    %c0_12 = arith.constant 0 : index
    %19 = vector.load %arg5[%c0_11, %c0_12] : memref<1x1xf32, #tpu.memory_space<vmem>>, vector<1x1xf32>
    %20 = vector.broadcast %19 : vector<1x1xf32> to vector<128x1xf32>
    %21 = arith.addf %18, %20 : vector<128x1xf32>
    %c0_13 = arith.constant 0 : index
    %c0_14 = arith.constant 0 : index
    %22 = vector.load %arg6[%c0_13, %c0_14] : memref<128x1xf32, #tpu.memory_space<vmem>>, vector<128x1xf32>
    tpu.vector_store %arg6[%c0_13, %c0_14], %21 {strides = array<i32>} : memref<128x1xf32, #tpu.memory_space<vmem>>, vector<128x1xf32>,
    return
  }
  func.func @transform_0(%arg0: i32) -> (i32, i32) {
    %c0_i32 = arith.constant 0 : i32
    %c0_i32_0 = arith.constant 0 : i32
    return %arg0, %c0_i32 : i32, i32
  }
  func.func @transform_1(%arg0: i32) -> (i32, i32) {
    %c0_i32 = arith.constant 0 : i32
    %c0_i32_0 = arith.constant 0 : i32
    %c0_i32_1 = arith.constant 0 : i32
    return %c0_i32, %c0_i32_0 : i32, i32
  }
  func.func @transform_2(%arg0: i32) -> (i32, i32) {
    %c0_i32 = arith.constant 0 : i32
    %c0_i32_0 = arith.constant 0 : i32
    %c0_i32_1 = arith.constant 0 : i32
    return %c0_i32, %c0_i32_0 : i32, i32
  }
  func.func @transform_3(%arg0: i32) -> (i32, i32) {
    %c0_i32 = arith.constant 0 : i32
    %c0_i32_0 = arith.constant 0 : i32
    %c0_i32_1 = arith.constant 0 : i32
    return %c0_i32, %c0_i32_0 : i32, i32
  }
  func.func @transform_4(%arg0: i32) -> (i32, i32) {
    %c0_i32 = arith.constant 0 : i32
    %c0_i32_0 = arith.constant 0 : i32
    %c0_i32_1 = arith.constant 0 : i32
    return %c0_i32, %c0_i32_0 : i32, i32
  }
  func.func @transform_5(%arg0: i32) -> (i32, i32) {
    %c0_i32 = arith.constant 0 : i32
    %c0_i32_0 = arith.constant 0 : i32
    return %arg0, %c0_i32 : i32, i32
  }
}

module attributes {stable_mosaic.version = 11 : i64} {
  func.func @gated_attention_kernel(%arg0: i32, %arg1: memref<128x128xf32, #tpu.memory_space<vmem>>, %arg2: memref<128x256xf32, #tpu.memory_space<vmem>>, %arg3: memref<1x256xf32, #tpu.memory_space<vmem>>, %arg4: memref<128x1xf32, #tpu.memory_space<vmem>>, %arg5: memref<1x1xf32, #tpu.memory_space<vmem>>, %arg6: memref<128x1xf32, #tpu.memory_space<vmem>>) attributes {dimension_semantics = [#tpu.dimension_semantics<parallel>], iteration_bounds = array<i64: 2>, scalar_prefetch = 0 : i64, scratch_operands = 0 : i64, tpu.core_type = #tpu.core_type<tc>, window_params = [{transform_indices = @transform_0, window_bounds = array<i64: 128, 128>}, {pipeline_mode = #tpu.pipeline_mode<synchronous>, transform_indices = @transform_1, window_bounds = array<i64: 128, 256>}, {pipeline_mode = #tpu.pipeline_mode<synchronous>, transform_indices = @transform_2, window_bounds = array<i64: 1, 256>}, {pipeline_mode = #tpu.pipeline_mode<synchronous>, transform_indices = @transform_3, window_bounds = array<i64: 128, 1>}, {pipeline_mode = #tpu.pipeline_mode<synchronous>, transform_indices = @transform_4, window_bounds = array<i64: 1, 1>}, {transform_indices = @transform_5, window_bounds = array<i64: 128, 1>}]} {
    %c0 = arith.constant 0 : index
    %c0_0 = arith.constant 0 : index
    %0 = vector.load %arg1[%c0, %c0_0] : memref<128x128xf32, #tpu.memory_space<vmem>>, vector<128x128xf32>
    %c0_1 = arith.constant 0 : index
    %c0_2 = arith.constant 0 : index
    %1 = vector.load %arg2[%c0_1, %c0_2] : memref<128x256xf32, #tpu.memory_space<vmem>>, vector<128x256xf32>
    %cst = arith.constant dense<0.000000e+00> : vector<128x256xf32>
    %2 = tpu.matmul %0, %1, %cst {dimension_numbers = #tpu.dot_dimension_numbers<[1], [0], [0], [1], [0, 0, 1, 1], [], []>} : vector<128x128xf32>, vector<128x256xf32>, vector<128x256xf32> -> vector<128x256xf32>
    %c0_3 = arith.constant 0 : index
    %c0_4 = arith.constant 0 : index
    %3 = vector.load %arg3[%c0_3, %c0_4] : memref<1x256xf32, #tpu.memory_space<vmem>>, vector<1x256xf32>
    %4 = vector.broadcast %3 : vector<1x256xf32> to vector<128x256xf32>
    %5 = arith.addf %2, %4 : vector<128x256xf32>
    %6 = vector.extract_strided_slice %5 {offsets = [0, 0], sizes = [128, 128], strides = [1, 1]} : vector<128x256xf32> to vector<128x128xf32>
    %7 = math.tanh %6 : vector<128x128xf32>
    %8 = vector.extract_strided_slice %5 {offsets = [0, 128], sizes = [128, 128], strides = [1, 1]} : vector<128x256xf32> to vector<128x128xf32>
    %cst_5 = arith.constant 5.000000e-01 : f32
    %9 = vector.broadcast %cst_5 : f32 to vector<128x128xf32>
    %10 = arith.mulf %9, %8 : vector<128x128xf32>
    %11 = math.tanh %10 : vector<128x128xf32>
    %cst_6 = arith.constant 1.000000e+00 : f32
    %12 = vector.broadcast %cst_6 : f32 to vector<128x128xf32>
    %13 = arith.addf %12, %11 : vector<128x128xf32>
    %cst_7 = arith.constant 5.000000e-01 : f32
    %14 = vector.broadcast %cst_7 : f32 to vector<128x128xf32>
    %15 = arith.mulf %14, %13 : vector<128x128xf32>
    %16 = arith.mulf %7, %15 : vector<128x128xf32>
    %c0_8 = arith.constant 0 : index
    %c0_9 = arith.constant 0 : index
    %17 = vector.load %arg4[%c0_8, %c0_9] : memref<128x1xf32, #tpu.memory_space<vmem>>, vector<128x1xf32>
    %cst_10 = arith.constant dense<0.000000e+00> : vector<128x1xf32>
    %18 = tpu.matmul %16, %17, %cst_10 {dimension_numbers = #tpu.dot_dimension_numbers<[1], [0], [0], [1], [0, 0, 1, 1], [], []>} : vector<128x128xf32>, vector<128x1xf32>, vector<128x1xf32> -> vector<128x1xf32>
    %c0_11 = arith.constant 0 : index
    %c0_12 = arith.constant 0 : index
    %19 = vector.load %arg5[%c0_11, %c0_12] : memref<1x1xf32, #tpu.memory_space<vmem>>, vector<1x1xf32>
    %20 = vector.broadcast %19 : vector<1x1xf32> to vector<128x1xf32>
    %21 = arith.addf %18, %20 : vector<128x1xf32>
    %c0_13 = arith.constant 0 : index
    %c0_14 = arith.constant 0 : index
    %22 = vector.load %arg6[%c0_13, %c0_14] : memref<128x1xf32, #tpu.memory_space<vmem>>, vector<128x1xf32>
    tpu.vector_store %arg6[%c0_13, %c0_14], %21 {strides = array<i32>} : memref<128x1xf32, #tpu.memory_space<vmem>>, vector<128x1xf32>,
    return
  }
  func.func @transform_0(%arg0: i32) -> (i32, i32) {
    %c0_i32 = arith.constant 0 : i32
    %c0_i32_0 = arith.constant 0 : i32
    return %arg0, %c0_i32 : i32, i32
  }
  func.func @transform_1(%arg0: i32) -> (i32, i32) {
    %c0_i32 = arith.constant 0 : i32
    %c0_i32_0 = arith.constant 0 : i32
    %c0_i32_1 = arith.constant 0 : i32
    return %c0_i32, %c0_i32_0 : i32, i32
  }
  func.func @transform_2(%arg0: i32) -> (i32, i32) {
    %c0_i32 = arith.constant 0 : i32
    %c0_i32_0 = arith.constant 0 : i32
    %c0_i32_1 = arith.constant 0 : i32
    return %c0_i32, %c0_i32_0 : i32, i32
  }
  func.func @transform_3(%arg0: i32) -> (i32, i32) {
    %c0_i32 = arith.constant 0 : i32
    %c0_i32_0 = arith.constant 0 : i32
    %c0_i32_1 = arith.constant 0 : i32
    return %c0_i32, %c0_i32_0 : i32, i32
  }
  func.func @transform_4(%arg0: i32) -> (i32, i32) {
    %c0_i32 = arith.constant 0 : i32
    %c0_i32_0 = arith.constant 0 : i32
    %c0_i32_1 = arith.constant 0 : i32
    return %c0_i32, %c0_i32_0 : i32, i32
  }
  func.func @transform_5(%arg0: i32) -> (i32, i32) {
    %c0_i32 = arith.constant 0 : i32
    %c0_i32_0 = arith.constant 0 : i32
    return %arg0, %c0_i32 : i32, i32
  }
}

</mosaic_0001>

<llo_original>
// kernel: _gated_attention_impl.1
$region0: #{_gated_attention_impl.1}
  #allocation0 [shape = 'u32[]', space=smem, size = 0x4, offset = 0x4, fixed_abs, tag = 'smem constant byte address 0x4 - core index']
  #allocation1 [shape = 'u32[72,128]{1,0:T(1,128)}', space=vmem, size = 0x9000, scoped, tag = 'internal scratch']
  #allocation2 [shape = 'f32[1,1]{1,0:T(1,128)S(1)}', space=vmem, size = 0x200, scoped, tag = 'scoped memory for _gated_attention_impl.1']
  %s0 = inlined_call_operand.hbm [shape: f32[256,128], index: 0, kind: input, shape index: {}]
  %s1 = inlined_call_operand.hbm [shape: f32[128,256], index: 1, kind: input, shape index: {}]
  %s2 = inlined_call_operand.vmem [shape: f32[1,256], index: 2, kind: input, shape index: {}]
  %s3 = inlined_call_operand.vmem [shape: f32[128,1], index: 3, kind: input, shape index: {}]
  %s4 = inlined_call_operand.<no memory space> [shape: f32[1,1], index: 4, kind: input, shape index: {}]
  %s5 = inlined_call_operand.vmem [shape: f32[256,1], index: 5, kind: output, shape index: {}]
  %s6 = sld [smem:[#allocation0]]
  $region61: #{_gated_attention_impl.1} parent=0
    _
  %s8 = ssub.s32 1, %s6
  %s9 = scalar_select 0, %s8, %s6
  %v10 = vstv %s4
  %11 = vst [vmem:[#allocation2] sm:$0x1] %v10
  $region1: #{_gated_attention_impl.1} parent=0
    #allocation3 [shape = 'u8[131072]{0}', space=vmem, size = 0x20000, scoped, tag = 'input window, operand 0']
    #allocation4 [shape = 's32[2]{0}', space=sflag, size = 0x8, scoped, tag = 'scoped memory for _gated_attention_impl.1']
    #allocation5 [shape = 'u8[131072]{0}', space=vmem, size = 0x20000, scoped, tag = 'input window, operand 1, single buffered']
    #allocation6 [shape = 's32[1]{0}', space=sflag, size = 0x4, scoped, tag = 'scoped memory for _gated_attention_impl.1']
    %12 = vsyncpa [#allocation4], 0
    %s13 = scalar_lea.sflag [#allocation4], 1
    %14 = vsyncpa %s13, 0
    %15 = vsyncpa [#allocation6], 0
    loop: start=0, step=1, limit=4
    $region2: #{_gated_attention_impl.1} parent=1 // loop_pre_header
      _
    $region3: #{_gated_attention_impl.1} parent=1 // loop_header
      %s17 = sphi 0, %s21
      %p18 = scmp.ge.s32.totalorder %s17, 4
      %s27 = sphi 0, %s29
      %s30 = sphi 0, %s27
      %s31 = sphi 0, %s30
      %s47 = sphi 0, %s31
      %s51 = sphi 0, %s51
      %s53 = sphi 0, %s51
      %s54 = sphi 0, %s53
      %s68 = sphi 0, %s54
      %s72 = sphi 0, %s72
      %s74 = sphi 0, %s72
      %s75 = sphi 0, %s74
      %s89 = sphi 0, %s75
      %s93 = sphi 0, %s93
      %s95 = sphi 0, %s93
      %s96 = sphi 0, %s95
      %s110 = sphi 0, %s96
      %s114 = sphi 0, %s114
      %s116 = sphi 0, %s114
      %s117 = sphi 0, %s116
      %s131 = sphi 0, %s117
      %s137 = sphi 0, %s139
      %s140 = sphi 0, %s137
      %s141 = sphi 0, %s140
      %s157 = sphi 0, %s141
    $region4: #{_gated_attention_impl.1} parent=1 // loop_header_branch
      %20 = sbr.rel (%p18) target = $region8
    $region5: #{_gated_attention_impl.1} parent=1 // loop_body
      %s22 = ssub.s32 %s17, 1
      %s23 = ssub.s32 %s17, 2
      %s24 = sadd.s32 %s17, 1
      %s25 = ssub.s32 %s17, %s24
      %p26 = scmp.eq.s32.totalorder %s25, 0
      %s28 = sadd.s32 %s27, 1
      %s29 = scalar_select %p26, %s27, %s28
      %p32 = pneg %p26
      %p33 = scmp.eq.s32.totalorder %s17, 1
      %p34 = por %p32, %p33
      %p35 = scmp.ne.s32.totalorder %s27, %s30
      %p36 = scmp.eq.s32.totalorder %s17, 0
      %p37 = por %p35, %p36
      %p38 = scmp.ne.s32.totalorder %s27, %s30
      %p39 = scmp.eq.s32.totalorder %s22, 1
      %p40 = por %p38, %p39
      %p41 = scmp.ne.s32.totalorder %s30, %s31
      %p42 = scmp.eq.s32.totalorder %s22, 0
      %p43 = por %p41, %p42
      %p44 = scmp.ne.s32.totalorder %s30, %s31
      %p45 = scmp.eq.s32.totalorder %s23, 1
      %p46 = por %p44, %p45
      %p48 = scmp.ne.s32.totalorder %s31, %s47
      %p49 = scmp.eq.s32.totalorder %s23, 0
      %p50 = por %p48, %p49
      %s52 = sadd.s32 %s51, 1
      %p55 = scmp.eq.s32.totalorder %s17, 1
      %p56 = scmp.ne.s32.totalorder %s51, %s53
      %p57 = scmp.eq.s32.totalorder %s17, 0
      %p58 = por %p56, %p57
      %p59 = scmp.ne.s32.totalorder %s51, %s53
      %p60 = scmp.eq.s32.totalorder %s22, 1
      %p61 = por %p59, %p60
      %p62 = scmp.ne.s32.totalorder %s53, %s54
      %p63 = scmp.eq.s32.totalorder %s22, 0
      %p64 = por %p62, %p63
      %p65 = scmp.ne.s32.totalorder %s53, %s54
      %p66 = scmp.eq.s32.totalorder %s23, 1
      %p67 = por %p65, %p66
      %p69 = scmp.ne.s32.totalorder %s54, %s68
      %p70 = scmp.eq.s32.totalorder %s23, 0
      %p71 = por %p69, %p70
      %s73 = sadd.s32 %s72, 1
      %p76 = scmp.eq.s32.totalorder %s17, 1
      %p77 = scmp.ne.s32.totalorder %s72, %s74
      %p78 = scmp.eq.s32.totalorder %s17, 0
      %p79 = por %p77, %p78
      %p80 = scmp.ne.s32.totalorder %s72, %s74
      %p81 = scmp.eq.s32.totalorder %s22, 1
      %p82 = por %p80, %p81
      %p83 = scmp.ne.s32.totalorder %s74, %s75
      %p84 = scmp.eq.s32.totalorder %s22, 0
      %p85 = por %p83, %p84
      %p86 = scmp.ne.s32.totalorder %s74, %s75
      %p87 = scmp.eq.s32.totalorder %s23, 1
      %p88 = por %p86, %p87
      %p90 = scmp.ne.s32.totalorder %s75, %s89
      %p91 = scmp.eq.s32.totalorder %s23, 0
      %p92 = por %p90, %p91
      %s94 = sadd.s32 %s93, 1
      %p97 = scmp.eq.s32.totalorder %s17, 1
      %p98 = scmp.ne.s32.totalorder %s93, %s95
      %p99 = scmp.eq.s32.totalorder %s17, 0
      %p100 = por %p98, %p99
      %p101 = scmp.ne.s32.totalorder %s93, %s95
      %p102 = scmp.eq.s32.totalorder %s22, 1
      %p103 = por %p101, %p102
      %p104 = scmp.ne.s32.totalorder %s95, %s96
      %p105 = scmp.eq.s32.totalorder %s22, 0
      %p106 = por %p104, %p105
      %p107 = scmp.ne.s32.totalorder %s95, %s96
      %p108 = scmp.eq.s32.totalorder %s23, 1
      %p109 = por %p107, %p108
      %p111 = scmp.ne.s32.totalorder %s96, %s110
      %p112 = scmp.eq.s32.totalorder %s23, 0
      %p113 = por %p111, %p112
      %s115 = sadd.s32 %s114, 1
      %p118 = scmp.eq.s32.totalorder %s17, 1
      %p119 = scmp.ne.s32.totalorder %s114, %s116
      %p120 = scmp.eq.s32.totalorder %s17, 0
      %p121 = por %p119, %p120
      %p122 = scmp.ne.s32.totalorder %s114, %s116
      %p123 = scmp.eq.s32.totalorder %s22, 1
      %p124 = por %p122, %p123
      %p125 = scmp.ne.s32.totalorder %s116, %s117
      %p126 = scmp.eq.s32.totalorder %s22, 0
      %p127 = por %p125, %p126
      %p128 = scmp.ne.s32.totalorder %s116, %s117
      %p129 = scmp.eq.s32.totalorder %s23, 1
      %p130 = por %p128, %p129
      %p132 = scmp.ne.s32.totalorder %s117, %s131
      %p133 = scmp.eq.s32.totalorder %s23, 0
      %p134 = por %p132, %p133
      %s135 = ssub.s32 %s17, %s24
      %p136 = scmp.eq.s32.totalorder %s135, 0
      %s138 = sadd.s32 %s137, 1
      %s139 = scalar_select %p136, %s137, %s138
      %p142 = pneg %p136
      %p143 = scmp.eq.s32.totalorder %s17, 1
      %p144 = por %p142, %p143
      %p145 = scmp.ne.s32.totalorder %s137, %s140
      %p146 = scmp.eq.s32.totalorder %s17, 0
      %p147 = por %p145, %p146
      %p148 = scmp.ne.s32.totalorder %s137, %s140
      %p149 = scmp.eq.s32.totalorder %s22, 1
      %p150 = por %p148, %p149
      %p151 = scmp.ne.s32.totalorder %s140, %s141
      %p152 = scmp.eq.s32.totalorder %s22, 0
      %p153 = por %p151, %p152
      %p154 = scmp.ne.s32.totalorder %s140, %s141
      %p155 = scmp.eq.s32.totalorder %s23, 1
      %p156 = por %p154, %p155
      %p158 = scmp.ne.s32.totalorder %s141, %s157
      %p159 = scmp.eq.s32.totalorder %s23, 0
      %p160 = por %p158, %p159
      %p161 = scmp.le.s32.totalorder 1, %s17
      %p162 = scmp.lt.s32.totalorder %s17, 3
      %p163 = pnand %p161, %p162
      %p164 = pneg %p163
      // Predicated region
      $region9: #{_gated_attention_impl.1} parent=5 // pred_check
        _
      $region10: #{_gated_attention_impl.1} parent=5 // pred_check_branch
        %166 = sbr.rel (%p163) target = $region12
      $region11: #{_gated_attention_impl.1} parent=5 // pred_region
        %s167 = ssub.s32 %s17, 1
        // Predicated region
        $region13: #{_gated_attention_impl.1} parent=11 // pred_check
          %p168 = pneg %p64
        $region14: #{_gated_attention_impl.1} parent=11 // pred_check_branch
          %170 = sbr.rel (%p168) target = $region16
        $region15: #{_gated_attention_impl.1} parent=11 // pred_region
          %172 = vsyncadd [#allocation6], 0
          %s173 = sshll.u32 %s1, 4
          %s174 = int_to_ptr.hbm [resolvable:$true] %s173
          %s175 = sshll.u32 [#allocation5], 4
          %s176 = int_to_ptr.vmem [resolvable:$true] %s175
          %181 = dma.hbm_to_vmem [thread:$0]  %s174, 4096, %s176, [#allocation6], 256, 256, 16
        $region16: #{_gated_attention_impl.1} parent=11 // pred_fallthru
          _
        // Predicated region
        $region17: #{_gated_attention_impl.1} parent=11 // pred_check
          %p182 = pneg %p85
        $region18: #{_gated_attention_impl.1} parent=11 // pred_check_branch
          %184 = sbr.rel (%p182) target = $region20
        $region19: #{_gated_attention_impl.1} parent=11 // pred_region
          _
        $region20: #{_gated_attention_impl.1} parent=11 // pred_fallthru
          _
        // Predicated region
        $region21: #{_gated_attention_impl.1} parent=11 // pred_check
          %p185 = pneg %p106
        $region22: #{_gated_attention_impl.1} parent=11 // pred_check_branch
          %187 = sbr.rel (%p185) target = $region24
        $region23: #{_gated_attention_impl.1} parent=11 // pred_region
          _
        $region24: #{_gated_attention_impl.1} parent=11 // pred_fallthru
          _
        // Predicated region
        $region25: #{_gated_attention_impl.1} parent=11 // pred_check
          %p188 = pneg %p127
        $region26: #{_gated_attention_impl.1} parent=11 // pred_check_branch
          %190 = sbr.rel (%p188) target = $region28
        $region27: #{_gated_attention_impl.1} parent=11 // pred_region
          _
        $region28: #{_gated_attention_impl.1} parent=11 // pred_fallthru
          _
      $region12: #{_gated_attention_impl.1} parent=5 // pred_fallthru
        _
      %p191 = scmp.lt.s32.totalorder %s17, 2
      // Predicated region
      $region29: #{_gated_attention_impl.1} parent=5 // pred_check
        %p192 = pneg %p191
      $region30: #{_gated_attention_impl.1} parent=5 // pred_check_branch
        %194 = sbr.rel (%p192) target = $region32
      $region31: #{_gated_attention_impl.1} parent=5 // pred_region
        // Predicated region
        $region33: #{_gated_attention_impl.1} parent=31 // pred_check
          %p195 = pneg %p37
        $region34: #{_gated_attention_impl.1} parent=31 // pred_check_branch
          %197 = sbr.rel (%p195) target = $region36
        $region35: #{_gated_attention_impl.1} parent=31 // pred_region
          %s198 = sand.u32 %s27, 1
          %s199 = scalar_lea.sflag [#allocation4], %s198
          %s200 = sand.u32 %s27, 1
          %s201 = smul.addr %s200, 128
          %s202 = scalar_lea.vmem [#allocation3], %s201
          %s203 = smul.u32 16, %s17
          %205 = vsyncadd %s199, 0
          %s206 = smul.addr %s203, 8
          %s207 = scalar_lea.hbm %s0, %s206
          %s208 = sshll.u32 %s207, 4
          %s209 = int_to_ptr.hbm [resolvable:$true] %s208
          %s210 = sshll.u32 %s202, 4
          %s211 = int_to_ptr.vmem [resolvable:$true] %s210
          %216 = dma.hbm_to_vmem [thread:$0]  %s209, 2048, %s211, %s199, 128, 128, 8
        $region36: #{_gated_attention_impl.1} parent=31 // pred_fallthru
          _
      $region32: #{_gated_attention_impl.1} parent=5 // pred_fallthru
        _
      %p217 = scmp.le.s32.totalorder 1, %s17
      %p218 = scmp.lt.s32.totalorder %s17, 3
      %p219 = pnand %p217, %p218
      %p220 = pneg %p219
      // Predicated region
      $region37: #{_gated_attention_impl.1} parent=5 // pred_check
        _
      $region38: #{_gated_attention_impl.1} parent=5 // pred_check_branch
        %222 = sbr.rel (%p219) target = $region40
      $region39: #{_gated_attention_impl.1} parent=5 // pred_region
        %s223 = ssub.s32 %s17, 1
        %s224 = sand.u32 %s30, 1
        %s225 = scalar_lea.sflag [#allocation4], %s224
        %s226 = sand.u32 %s30, 1
        %s227 = smul.addr %s226, 128
        %s228 = scalar_lea.vmem [#allocation3], %s227
        // Predicated region
        $region41: #{_gated_attention_impl.1} parent=39 // pred_check
          %p229 = pneg %p43
        $region42: #{_gated_attention_impl.1} parent=39 // pred_check_branch
          %231 = sbr.rel (%p229) target = $region44
        $region43: #{_gated_attention_impl.1} parent=39 // pred_region
          %233 = dma.done %s225, 2048
        $region44: #{_gated_attention_impl.1} parent=39 // pred_fallthru
          _
        // Predicated region
        $region45: #{_gated_attention_impl.1} parent=39 // pred_check
          %p234 = pneg %p64
        $region46: #{_gated_attention_impl.1} parent=39 // pred_check_branch
          %236 = sbr.rel (%p234) target = $region48
        $region47: #{_gated_attention_impl.1} parent=39 // pred_region
          %238 = dma.done [#allocation6], 4096
        $region48: #{_gated_attention_impl.1} parent=39 // pred_fallthru
          _
        %s239 = sand.u32 %s30, 1
        %s240 = scalar_lea.sflag [#allocation4], %s239
        %s241 = sand.u32 %s30, 1
        %s242 = smul.addr %s241, 128
        %s243 = scalar_lea.vmem [#allocation3], %s242
        %p244 = pneg %p43
        %p245 = pneg %p40
        %p246 = pneg %p64
        %p247 = pneg %p61
        %p248 = pneg %p85
        %p249 = pneg %p82
        %p250 = pneg %p106
        %p251 = pneg %p103
        %p252 = pneg %p127
        %p253 = pneg %p124
        %p254 = pneg %p153
        %p255 = pneg %p150
        %s256 = smul.u32 16, %s22
        %p257 = scmp.lt.s32.totalorder %s256, 31
        %s258 = scalar_select %p257, %s256, 31
        %s259 = smul.addr %s258, 8
        %s260 = scalar_lea.vmem %s5, %s259
        %s261 = smul.u32 16, %s22
        %s262 = smul.u32 16, %s22
        %p263 = scmp.lt.s32.totalorder %s262, 31
        %s264 = scalar_select %p263, %s262, 31
        %s265 = smul.addr %s264, 8
        %s266 = scalar_lea.vmem %s5, %s265
        %s267 = smul.u32 16, %s22
        %v268 = vld [vmem:[%s228] sm:$0xff]
        %v269 = vld [vmem:[%s228 + $0x8] sm:$0xff]
        %v270 = vld [vmem:[%s228 + $0x10] sm:$0xff]
        %v271 = vld [vmem:[%s228 + $0x18] sm:$0xff]
        %v272 = vld [vmem:[%s228 + $0x20] sm:$0xff]
        %v273 = vld [vmem:[%s228 + $0x28] sm:$0xff]
        %v274 = vld [vmem:[%s228 + $0x30] sm:$0xff]
        %v275 = vld [vmem:[%s228 + $0x38] sm:$0xff]
        %v276 = vld [vmem:[%s228 + $0x40] sm:$0xff]
        %v277 = vld [vmem:[%s228 + $0x48] sm:$0xff]
        %v278 = vld [vmem:[%s228 + $0x50] sm:$0xff]
        %v279 = vld [vmem:[%s228 + $0x58] sm:$0xff]
        %v280 = vld [vmem:[%s228 + $0x60] sm:$0xff]
        %v281 = vld [vmem:[%s228 + $0x68] sm:$0xff]
        %v282 = vld [vmem:[%s228 + $0x70] sm:$0xff]
        %v283 = vld [vmem:[%s228 + $0x78] sm:$0xff]
        %v284 = vld [vmem:[#allocation5] sm:$0xff]
        %v285 = vld [vmem:[#allocation5 + $0x8] sm:$0xff]
        %v286 = vld [vmem:[#allocation5 + $0x10] sm:$0xff]
        %v287 = vld [vmem:[#allocation5 + $0x18] sm:$0xff]
        %v288 = vld [vmem:[#allocation5 + $0x20] sm:$0xff]
        %v289 = vld [vmem:[#allocation5 + $0x28] sm:$0xff]
        %v290 = vld [vmem:[#allocation5 + $0x30] sm:$0xff]
        %v291 = vld [vmem:[#allocation5 + $0x38] sm:$0xff]
        %v292 = vld [vmem:[#allocation5 + $0x40] sm:$0xff]
        %v293 = vld [vmem:[#allocation5 + $0x48] sm:$0xff]
        %v294 = vld [vmem:[#allocation5 + $0x50] sm:$0xff]
        %v295 = vld [vmem:[#allocation5 + $0x58] sm:$0xff]
        %v296 = vld [vmem:[#allocation5 + $0x60] sm:$0xff]
        %v297 = vld [vmem:[#allocation5 + $0x68] sm:$0xff]
        %v298 = vld [vmem:[#allocation5 + $0x70] sm:$0xff]
        %v299 = vld [vmem:[#allocation5 + $0x78] sm:$0xff]
        %v300 = vld [vmem:[#allocation5 + $0x80] sm:$0xff]
        %v301 = vld [vmem:[#allocation5 + $0x88] sm:$0xff]
        %v302 = vld [vmem:[#allocation5 + $0x90] sm:$0xff]
        %v303 = vld [vmem:[#allocation5 + $0x98] sm:$0xff]
        %v304 = vld [vmem:[#allocation5 + $0xa0] sm:$0xff]
        %v305 = vld [vmem:[#allocation5 + $0xa8] sm:$0xff]
        %v306 = vld [vmem:[#allocation5 + $0xb0] sm:$0xff]
        %v307 = vld [vmem:[#allocation5 + $0xb8] sm:$0xff]
        %v308 = vld [vmem:[#allocation5 + $0xc0] sm:$0xff]
        %v309 = vld [vmem:[#allocation5 + $0xc8] sm:$0xff]
        %v310 = vld [vmem:[#allocation5 + $0xd0] sm:$0xff]
        %v311 = vld [vmem:[#allocation5 + $0xd8] sm:$0xff]
        %v312 = vld [vmem:[#allocation5 + $0xe0] sm:$0xff]
        %v313 = vld [vmem:[#allocation5 + $0xe8] sm:$0xff]
        %v314 = vld [vmem:[#allocation5 + $0xf0] sm:$0xff]
        %v315 = vld [vmem:[#allocation5 + $0xf8] sm:$0xff]
        %v316 = vld [vmem:[%s2] sm:$0x3]
        %v318 = vperm.slane %v316, 0
        %v319 = vperm.slane %v316, 1
        %322 = vmatpush.msra.mxu0 %v314
        %323 = vmatpush.msra.mxu0 %v312
        %324 = vmatpush.msra.mxu0 %v310
        %325 = vmatpush.msra.mxu0 %v308
        %326 = vmatpush.msra.mxu0 %v306
        %327 = vmatpush.msra.mxu0 %v304
        %328 = vmatpush.msra.mxu0 %v302
        %329 = vmatpush.msra.mxu0 %v300
        %330 = vmatpush.msra.mxu0 %v298
        %331 = vmatpush.msra.mxu0 %v296
        %332 = vmatpush.msra.mxu0 %v294
        %333 = vmatpush.msra.mxu0 %v292
        %334 = vmatpush.msra.mxu0 %v290
        %335 = vmatpush.msra.mxu0 %v288
        %336 = vmatpush.msra.mxu0 %v286
        %337 = vmatpush.msra.mxu0 %v284
        %338 = vmatmul.f32.gmra.mxu0 %v268
        %v339 = vpop.f32.mrf.mxu0
        %v340 = vadd.f32 %v318, %v339
        %341 = vmatmul.f32.gmra.mxu0 %v269
        %v342 = vpop.f32.mrf.mxu0
        %v343 = vadd.f32 %v318, %v342
        %344 = vmatmul.f32.gmra.mxu0 %v270
        %v345 = vpop.f32.mrf.mxu0
        %v346 = vadd.f32 %v318, %v345
        %347 = vmatmul.f32.gmra.mxu0 %v271
        %v348 = vpop.f32.mrf.mxu0
        %v349 = vadd.f32 %v318, %v348
        %350 = vmatmul.f32.gmra.mxu0 %v272
        %v351 = vpop.f32.mrf.mxu0
        %v352 = vadd.f32 %v318, %v351
        %353 = vmatmul.f32.gmra.mxu0 %v273
        %v354 = vpop.f32.mrf.mxu0
        %v355 = vadd.f32 %v318, %v354
        %356 = vmatmul.f32.gmra.mxu0 %v274
        %v357 = vpop.f32.mrf.mxu0
        %v358 = vadd.f32 %v318, %v357
        %359 = vmatmul.f32.gmra.mxu0 %v275
        %v360 = vpop.f32.mrf.mxu0
        %v361 = vadd.f32 %v318, %v360
        %362 = vmatmul.f32.gmra.mxu0 %v276
        %v363 = vpop.f32.mrf.mxu0
        %v364 = vadd.f32 %v318, %v363
        %365 = vmatmul.f32.gmra.mxu0 %v277
        %v366 = vpop.f32.mrf.mxu0
        %v367 = vadd.f32 %v318, %v366
        %368 = vmatmul.f32.gmra.mxu0 %v278
        %v369 = vpop.f32.mrf.mxu0
        %v370 = vadd.f32 %v318, %v369
        %371 = vmatmul.f32.gmra.mxu0 %v279
        %v372 = vpop.f32.mrf.mxu0
        %v373 = vadd.f32 %v318, %v372
        %374 = vmatmul.f32.gmra.mxu0 %v280
        %v375 = vpop.f32.mrf.mxu0
        %v376 = vadd.f32 %v318, %v375
        %377 = vmatmul.f32.gmra.mxu0 %v281
        %v378 = vpop.f32.mrf.mxu0
        %v379 = vadd.f32 %v318, %v378
        %380 = vmatmul.f32.gmra.mxu0 %v282
        %v381 = vpop.f32.mrf.mxu0
        %v382 = vadd.f32 %v318, %v381
        %383 = vmatmul.f32.gmra.mxu0 %v283
        %v384 = vpop.f32.mrf.mxu0
        %v385 = vadd.f32 %v318, %v384
        %386 = vdwg.mxu0
        %387 = vmatpush.msra.mxu0 %v315
        %388 = vmatpush.msra.mxu0 %v313
        %389 = vmatpush.msra.mxu0 %v311
        %390 = vmatpush.msra.mxu0 %v309
        %391 = vmatpush.msra.mxu0 %v307
        %392 = vmatpush.msra.mxu0 %v305
        %393 = vmatpush.msra.mxu0 %v303
        %394 = vmatpush.msra.mxu0 %v301
        %395 = vmatpush.msra.mxu0 %v299
        %396 = vmatpush.msra.mxu0 %v297
        %397 = vmatpush.msra.mxu0 %v295
        %398 = vmatpush.msra.mxu0 %v293
        %399 = vmatpush.msra.mxu0 %v291
        %400 = vmatpush.msra.mxu0 %v289
        %401 = vmatpush.msra.mxu0 %v287
        %402 = vmatpush.msra.mxu0 %v285
        %403 = vmatmul.f32.gmra.mxu0 %v268
        %v404 = vpop.f32.mrf.mxu0
        %v405 = vadd.f32 %v319, %v404
        %406 = vmatmul.f32.gmra.mxu0 %v269
        %v407 = vpop.f32.mrf.mxu0
        %v408 = vadd.f32 %v319, %v407
        %409 = vmatmul.f32.gmra.mxu0 %v270
        %v410 = vpop.f32.mrf.mxu0
        %v411 = vadd.f32 %v319, %v410
        %412 = vmatmul.f32.gmra.mxu0 %v271
        %v413 = vpop.f32.mrf.mxu0
        %v414 = vadd.f32 %v319, %v413
        %415 = vmatmul.f32.gmra.mxu0 %v272
        %v416 = vpop.f32.mrf.mxu0
        %v417 = vadd.f32 %v319, %v416
        %418 = vmatmul.f32.gmra.mxu0 %v273
        %v419 = vpop.f32.mrf.mxu0
        %v420 = vadd.f32 %v319, %v419
        %421 = vmatmul.f32.gmra.mxu0 %v274
        %v422 = vpop.f32.mrf.mxu0
        %v423 = vadd.f32 %v319, %v422
        %424 = vmatmul.f32.gmra.mxu0 %v275
        %v425 = vpop.f32.mrf.mxu0
        %v426 = vadd.f32 %v319, %v425
        %427 = vmatmul.f32.gmra.mxu0 %v276
        %v428 = vpop.f32.mrf.mxu0
        %v429 = vadd.f32 %v319, %v428
        %430 = vmatmul.f32.gmra.mxu0 %v277
        %v431 = vpop.f32.mrf.mxu0
        %v432 = vadd.f32 %v319, %v431
        %433 = vmatmul.f32.gmra.mxu0 %v278
        %v434 = vpop.f32.mrf.mxu0
        %v435 = vadd.f32 %v319, %v434
        %436 = vmatmul.f32.gmra.mxu0 %v279
        %v437 = vpop.f32.mrf.mxu0
        %v438 = vadd.f32 %v319, %v437
        %439 = vmatmul.f32.gmra.mxu0 %v280
        %v440 = vpop.f32.mrf.mxu0
        %v441 = vadd.f32 %v319, %v440
        %442 = vmatmul.f32.gmra.mxu0 %v281
        %v443 = vpop.f32.mrf.mxu0
        %v444 = vadd.f32 %v319, %v443
        %445 = vmatmul.f32.gmra.mxu0 %v282
        %v446 = vpop.f32.mrf.mxu0
        %v447 = vadd.f32 %v319, %v446
        %448 = vmatmul.f32.gmra.mxu0 %v283
        %v449 = vpop.f32.mrf.mxu0
        %v450 = vadd.f32 %v319, %v449
        %451 = vdwg.mxu0
        %v452 = vtanh.pop %v340
        %v453 = vtanh.pop %v343
        %v454 = vtanh.pop %v346
        %v455 = vtanh.pop %v349
        %v456 = vtanh.pop %v352
        %v457 = vtanh.pop %v355
        %v458 = vtanh.pop %v358
        %v459 = vtanh.pop %v361
        %v460 = vtanh.pop %v364
        %v461 = vtanh.pop %v367
        %v462 = vtanh.pop %v370
        %v463 = vtanh.pop %v373
        %v464 = vtanh.pop %v376
        %v465 = vtanh.pop %v379
        %v466 = vtanh.pop %v382
        %v467 = vtanh.pop %v385
        %v468 = vmul.f32 %v405, 0.5
        %v469 = vmul.f32 %v408, 0.5
        %v470 = vmul.f32 %v411, 0.5
        %v471 = vmul.f32 %v414, 0.5
        %v472 = vmul.f32 %v417, 0.5
        %v473 = vmul.f32 %v420, 0.5
        %v474 = vmul.f32 %v423, 0.5
        %v475 = vmul.f32 %v426, 0.5
        %v476 = vmul.f32 %v429, 0.5
        %v477 = vmul.f32 %v432, 0.5
        %v478 = vmul.f32 %v435, 0.5
        %v479 = vmul.f32 %v438, 0.5
        %v480 = vmul.f32 %v441, 0.5
        %v481 = vmul.f32 %v444, 0.5
        %v482 = vmul.f32 %v447, 0.5
        %v483 = vmul.f32 %v450, 0.5
        %v484 = vtanh.pop %v468
        %v485 = vtanh.pop %v469
        %v486 = vtanh.pop %v470
        %v487 = vtanh.pop %v471
        %v488 = vtanh.pop %v472
        %v489 = vtanh.pop %v473
        %v490 = vtanh.pop %v474
        %v491 = vtanh.pop %v475
        %v492 = vtanh.pop %v476
        %v493 = vtanh.pop %v477
        %v494 = vtanh.pop %v478
        %v495 = vtanh.pop %v479
        %v496 = vtanh.pop %v480
        %v497 = vtanh.pop %v481
        %v498 = vtanh.pop %v482
        %v499 = vtanh.pop %v483
        %v500 = vadd.f32 %v484, 1.0
        %v501 = vadd.f32 %v485, 1.0
        %v502 = vadd.f32 %v486, 1.0
        %v503 = vadd.f32 %v487, 1.0
        %v504 = vadd.f32 %v488, 1.0
        %v505 = vadd.f32 %v489, 1.0
        %v506 = vadd.f32 %v490, 1.0
        %v507 = vadd.f32 %v491, 1.0
        %v508 = vadd.f32 %v492, 1.0
        %v509 = vadd.f32 %v493, 1.0
        %v510 = vadd.f32 %v494, 1.0
        %v511 = vadd.f32 %v495, 1.0
        %v512 = vadd.f32 %v496, 1.0
        %v513 = vadd.f32 %v497, 1.0
        %v514 = vadd.f32 %v498, 1.0
        %v515 = vadd.f32 %v499, 1.0
        %v516 = vmul.f32 %v500, 0.5
        %v517 = vmul.f32 %v501, 0.5
        %v518 = vmul.f32 %v502, 0.5
        %v519 = vmul.f32 %v503, 0.5
        %v520 = vmul.f32 %v504, 0.5
        %v521 = vmul.f32 %v505, 0.5
        %v522 = vmul.f32 %v506, 0.5
        %v523 = vmul.f32 %v507, 0.5
        %v524 = vmul.f32 %v508, 0.5
        %v525 = vmul.f32 %v509, 0.5
        %v526 = vmul.f32 %v510, 0.5
        %v527 = vmul.f32 %v511, 0.5
        %v528 = vmul.f32 %v512, 0.5
        %v529 = vmul.f32 %v513, 0.5
        %v530 = vmul.f32 %v514, 0.5
        %v531 = vmul.f32 %v515, 0.5
        %v532 = vmul.f32 %v452, %v516
        %v533 = vmul.f32 %v453, %v517
        %v534 = vmul.f32 %v454, %v518
        %v535 = vmul.f32 %v455, %v519
        %v536 = vmul.f32 %v456, %v520
        %v537 = vmul.f32 %v457, %v521
        %v538 = vmul.f32 %v458, %v522
        %v539 = vmul.f32 %v459, %v523
        %v540 = vmul.f32 %v460, %v524
        %v541 = vmul.f32 %v461, %v525
        %v542 = vmul.f32 %v462, %v526
        %v543 = vmul.f32 %v463, %v527
        %v544 = vmul.f32 %v464, %v528
        %v545 = vmul.f32 %v465, %v529
        %v546 = vmul.f32 %v466, %v530
        %v547 = vmul.f32 %v467, %v531
        %v548 = vld [vmem:[%s3] sm:$0xff]
        %v549 = vld [vmem:[%s3 + $0x8] sm:$0xff]
        %v550 = vld [vmem:[%s3 + $0x10] sm:$0xff]
        %v551 = vld [vmem:[%s3 + $0x18] sm:$0xff]
        %v552 = vld [vmem:[%s3 + $0x20] sm:$0xff]
        %v553 = vld [vmem:[%s3 + $0x28] sm:$0xff]
        %v554 = vld [vmem:[%s3 + $0x30] sm:$0xff]
        %v555 = vld [vmem:[%s3 + $0x38] sm:$0xff]
        %v556 = vld [vmem:[%s3 + $0x40] sm:$0xff]
        %v557 = vld [vmem:[%s3 + $0x48] sm:$0xff]
        %v558 = vld [vmem:[%s3 + $0x50] sm:$0xff]
        %v559 = vld [vmem:[%s3 + $0x58] sm:$0xff]
        %v560 = vld [vmem:[%s3 + $0x60] sm:$0xff]
        %v561 = vld [vmem:[%s3 + $0x68] sm:$0xff]
        %v562 = vld [vmem:[%s3 + $0x70] sm:$0xff]
        %v563 = vld [vmem:[%s3 + $0x78] sm:$0xff]
        %v564 = vld [vmem:[#allocation2] sm:$0x1]
        %v566 = vperm.slane %v564, 0
        %568 = vmatpush.msra.mxu0 %v563
        %569 = vmatpush.msra.mxu0 %v562
        %570 = vmatpush.msra.mxu0 %v561
        %571 = vmatpush.msra.mxu0 %v560
        %572 = vmatpush.msra.mxu0 %v559
        %573 = vmatpush.msra.mxu0 %v558
        %574 = vmatpush.msra.mxu0 %v557
        %575 = vmatpush.msra.mxu0 %v556
        %576 = vmatpush.msra.mxu0 %v555
        %577 = vmatpush.msra.mxu0 %v554
        %578 = vmatpush.msra.mxu0 %v553
        %579 = vmatpush.msra.mxu0 %v552
        %580 = vmatpush.msra.mxu0 %v551
        %581 = vmatpush.msra.mxu0 %v550
        %582 = vmatpush.msra.mxu0 %v549
        %583 = vmatpush.msra.mxu0 %v548
        %584 = vmatmul.f32.gmra.mxu0 %v532
        %v585 = vpop.f32.mrf.mxu0
        %v586 = vadd.f32 %v566, %v585
        %587 = vmatmul.f32.gmra.mxu0 %v533
        %v588 = vpop.f32.mrf.mxu0
        %v589 = vadd.f32 %v566, %v588
        %590 = vmatmul.f32.gmra.mxu0 %v534
        %v591 = vpop.f32.mrf.mxu0
        %v592 = vadd.f32 %v566, %v591
        %593 = vmatmul.f32.gmra.mxu0 %v535
        %v594 = vpop.f32.mrf.mxu0
        %v595 = vadd.f32 %v566, %v594
        %596 = vmatmul.f32.gmra.mxu0 %v536
        %v597 = vpop.f32.mrf.mxu0
        %v598 = vadd.f32 %v566, %v597
        %599 = vmatmul.f32.gmra.mxu0 %v537
        %v600 = vpop.f32.mrf.mxu0
        %v601 = vadd.f32 %v566, %v600
        %602 = vmatmul.f32.gmra.mxu0 %v538
        %v603 = vpop.f32.mrf.mxu0
        %v604 = vadd.f32 %v566, %v603
        %605 = vmatmul.f32.gmra.mxu0 %v539
        %v606 = vpop.f32.mrf.mxu0
        %v607 = vadd.f32 %v566, %v606
        %608 = vmatmul.f32.gmra.mxu0 %v540
        %v609 = vpop.f32.mrf.mxu0
        %v610 = vadd.f32 %v566, %v609
        %611 = vmatmul.f32.gmra.mxu0 %v541
        %v612 = vpop.f32.mrf.mxu0
        %v613 = vadd.f32 %v566, %v612
        %614 = vmatmul.f32.gmra.mxu0 %v542
        %v615 = vpop.f32.mrf.mxu0
        %v616 = vadd.f32 %v566, %v615
        %617 = vmatmul.f32.gmra.mxu0 %v543
        %v618 = vpop.f32.mrf.mxu0
        %v619 = vadd.f32 %v566, %v618
        %620 = vmatmul.f32.gmra.mxu0 %v544
        %v621 = vpop.f32.mrf.mxu0
        %v622 = vadd.f32 %v566, %v621
        %623 = vmatmul.f32.gmra.mxu0 %v545
        %v624 = vpop.f32.mrf.mxu0
        %v625 = vadd.f32 %v566, %v624
        %626 = vmatmul.f32.gmra.mxu0 %v546
        %v627 = vpop.f32.mrf.mxu0
        %v628 = vadd.f32 %v566, %v627
        %629 = vmatmul.f32.gmra.mxu0 %v547
        %v630 = vpop.f32.mrf.mxu0
        %v631 = vadd.f32 %v566, %v630
        %632 = vdwg.mxu0
        %vm633 = vcmask 7168
        %634 = vst.msk [vmem:[%s266] sm:$0xff] %vm633, %v586
        %635 = vst.msk [vmem:[%s266 + $0x8] sm:$0xff] %vm633, %v589
        %636 = vst.msk [vmem:[%s266 + $0x10] sm:$0xff] %vm633, %v592
        %637 = vst.msk [vmem:[%s266 + $0x18] sm:$0xff] %vm633, %v595
        %638 = vst.msk [vmem:[%s266 + $0x20] sm:$0xff] %vm633, %v598
        %639 = vst.msk [vmem:[%s266 + $0x28] sm:$0xff] %vm633, %v601
        %640 = vst.msk [vmem:[%s266 + $0x30] sm:$0xff] %vm633, %v604
        %641 = vst.msk [vmem:[%s266 + $0x38] sm:$0xff] %vm633, %v607
        %642 = vst.msk [vmem:[%s266 + $0x40] sm:$0xff] %vm633, %v610
        %643 = vst.msk [vmem:[%s266 + $0x48] sm:$0xff] %vm633, %v613
        %644 = vst.msk [vmem:[%s266 + $0x50] sm:$0xff] %vm633, %v616
        %645 = vst.msk [vmem:[%s266 + $0x58] sm:$0xff] %vm633, %v619
        %646 = vst.msk [vmem:[%s266 + $0x60] sm:$0xff] %vm633, %v622
        %647 = vst.msk [vmem:[%s266 + $0x68] sm:$0xff] %vm633, %v625
        %648 = vst.msk [vmem:[%s266 + $0x70] sm:$0xff] %vm633, %v628
        %649 = vst.msk [vmem:[%s266 + $0x78] sm:$0xff] %vm633, %v631
        %s650 = smul.u32 16, %s22
        %p651 = scmp.lt.s32.totalorder %s650, 31
        %s652 = scalar_select %p651, %s650, 31
        %s653 = smul.addr %s652, 8
        %s654 = scalar_lea.vmem %s5, %s653
        // Predicated region
        $region49: #{_gated_attention_impl.1} parent=39 // pred_check
          %p655 = pneg %p150
        $region50: #{_gated_attention_impl.1} parent=39 // pred_check_branch
          %657 = sbr.rel (%p655) target = $region52
        $region51: #{_gated_attention_impl.1} parent=39 // pred_region
          %s658 = smul.u32 16, %s22
        $region52: #{_gated_attention_impl.1} parent=39 // pred_fallthru
          _
      $region40: #{_gated_attention_impl.1} parent=5 // pred_fallthru
        _
      %p659 = scmp.le.s32.totalorder 2, %s17
      // Predicated region
      $region53: #{_gated_attention_impl.1} parent=5 // pred_check
        %p660 = pneg %p659
      $region54: #{_gated_attention_impl.1} parent=5 // pred_check_branch
        %662 = sbr.rel (%p660) target = $region56
      $region55: #{_gated_attention_impl.1} parent=5 // pred_region
        %s663 = ssub.s32 %s17, 2
        // Predicated region
        $region57: #{_gated_attention_impl.1} parent=55 // pred_check
          %p664 = pneg %p156
        $region58: #{_gated_attention_impl.1} parent=55 // pred_check_branch
          %666 = sbr.rel (%p664) target = $region60
        $region59: #{_gated_attention_impl.1} parent=55 // pred_region
          %s667 = smul.u32 16, %s23
          %p668 = scmp.lt.s32.totalorder %s667, 31
          %s669 = scalar_select %p668, %s667, 31
          %s670 = smul.addr %s669, 8
          %s671 = scalar_lea.vmem %s5, %s670
        $region60: #{_gated_attention_impl.1} parent=55 // pred_fallthru
          _
      $region56: #{_gated_attention_impl.1} parent=5 // pred_fallthru
        _
    $region6: #{_gated_attention_impl.1} parent=1 // loop_footer
      %s21 = sadd.s32 1, %s17
    $region7: #{_gated_attention_impl.1} parent=1 // loop_footer_branch
      %16 = sbr.rel target = $region3
    $region8: #{_gated_attention_impl.1} parent=1 // loop_exit
      _
    %672 = vsyncpa [#allocation4], 1
    %s673 = scalar_lea.sflag [#allocation4], 1
    %674 = vsyncpa %s673, 1
    %675 = vsyncpa [#allocation6], 1

// kernel: _gated_attention_impl.1
$region0: #{_gated_attention_impl.1}
  #allocation0 [shape = 'u32[]', space=smem, size = 0x4, offset = 0x4, fixed_abs, tag = 'smem constant byte address 0x4 - core index']
  #allocation1 [shape = 'u32[72,128]{1,0:T(1,128)}', space=vmem, size = 0x9000, scoped, tag = 'internal scratch']
  #allocation2 [shape = 'f32[1,1]{1,0:T(1,128)S(1)}', space=vmem, size = 0x200, scoped, tag = 'scoped memory for _gated_attention_impl.1']
  %s0 = inlined_call_operand.hbm [shape: f32[256,128], index: 0, kind: input, shape index: {}]
  %s1 = inlined_call_operand.hbm [shape: f32[128,256], index: 1, kind: input, shape index: {}]
  %s2 = inlined_call_operand.vmem [shape: f32[1,256], index: 2, kind: input, shape index: {}]
  %s3 = inlined_call_operand.vmem [shape: f32[128,1], index: 3, kind: input, shape index: {}]
  %s4 = inlined_call_operand.<no memory space> [shape: f32[1,1], index: 4, kind: input, shape index: {}]
  %s5 = inlined_call_operand.vmem [shape: f32[256,1], index: 5, kind: output, shape index: {}]
  %s6 = sld [smem:[#allocation0]]
  $region61: #{_gated_attention_impl.1} parent=0
    _
  %s8 = ssub.s32 1, %s6
  %s9 = scalar_select 0, %s8, %s6
  %v10 = vstv %s4
  %11 = vst [vmem:[#allocation2] sm:$0x1] %v10
  $region1: #{_gated_attention_impl.1} parent=0
    #allocation3 [shape = 'u8[131072]{0}', space=vmem, size = 0x20000, scoped, tag = 'input window, operand 0']
    #allocation4 [shape = 's32[2]{0}', space=sflag, size = 0x8, scoped, tag = 'scoped memory for _gated_attention_impl.1']
    #allocation5 [shape = 'u8[131072]{0}', space=vmem, size = 0x20000, scoped, tag = 'input window, operand 1, single buffered']
    #allocation6 [shape = 's32[1]{0}', space=sflag, size = 0x4, scoped, tag = 'scoped memory for _gated_attention_impl.1']
    %12 = vsyncpa [#allocation4], 0
    %s13 = scalar_lea.sflag [#allocation4], 1
    %14 = vsyncpa %s13, 0
    %15 = vsyncpa [#allocation6], 0
    loop: start=0, step=1, limit=4
    $region2: #{_gated_attention_impl.1} parent=1 // loop_pre_header
      _
    $region3: #{_gated_attention_impl.1} parent=1 // loop_header
      %s17 = sphi 0, %s21
      %p18 = scmp.ge.s32.totalorder %s17, 4
      %s27 = sphi 0, %s29
      %s30 = sphi 0, %s27
      %s31 = sphi 0, %s30
      %s47 = sphi 0, %s31
      %s51 = sphi 0, %s51
      %s53 = sphi 0, %s51
      %s54 = sphi 0, %s53
      %s68 = sphi 0, %s54
      %s72 = sphi 0, %s72
      %s74 = sphi 0, %s72
      %s75 = sphi 0, %s74
      %s89 = sphi 0, %s75
      %s93 = sphi 0, %s93
      %s95 = sphi 0, %s93
      %s96 = sphi 0, %s95
      %s110 = sphi 0, %s96
      %s114 = sphi 0, %s114
      %s116 = sphi 0, %s114
      %s117 = sphi 0, %s116
      %s131 = sphi 0, %s117
      %s137 = sphi 0, %s139
      %s140 = sphi 0, %s137
      %s141 = sphi 0, %s140
      %s157 = sphi 0, %s141
    $region4: #{_gated_attention_impl.1} parent=1 // loop_header_branch
      %20 = sbr.rel (%p18) target = $region8
    $region5: #{_gated_attention_impl.1} parent=1 // loop_body
      %s22 = ssub.s32 %s17, 1
      %s23 = ssub.s32 %s17, 2
      %s24 = sadd.s32 %s17, 1
      %s25 = ssub.s32 %s17, %s24
      %p26 = scmp.eq.s32.totalorder %s25, 0
      %s28 = sadd.s32 %s27, 1
      %s29 = scalar_select %p26, %s27, %s28
      %p32 = pneg %p26
      %p33 = scmp.eq.s32.totalorder %s17, 1
      %p34 = por %p32, %p33
      %p35 = scmp.ne.s32.totalorder %s27, %s30
      %p36 = scmp.eq.s32.totalorder %s17, 0
      %p37 = por %p35, %p36
      %p38 = scmp.ne.s32.totalorder %s27, %s30
      %p39 = scmp.eq.s32.totalorder %s22, 1
      %p40 = por %p38, %p39
      %p41 = scmp.ne.s32.totalorder %s30, %s31
      %p42 = scmp.eq.s32.totalorder %s22, 0
      %p43 = por %p41, %p42
      %p44 = scmp.ne.s32.totalorder %s30, %s31
      %p45 = scmp.eq.s32.totalorder %s23, 1
      %p46 = por %p44, %p45
      %p48 = scmp.ne.s32.totalorder %s31, %s47
      %p49 = scmp.eq.s32.totalorder %s23, 0
      %p50 = por %p48, %p49
      %s52 = sadd.s32 %s51, 1
      %p55 = scmp.eq.s32.totalorder %s17, 1
      %p56 = scmp.ne.s32.totalorder %s51, %s53
      %p57 = scmp.eq.s32.totalorder %s17, 0
      %p58 = por %p56, %p57
      %p59 = scmp.ne.s32.totalorder %s51, %s53
      %p60 = scmp.eq.s32.totalorder %s22, 1
      %p61 = por %p59, %p60
      %p62 = scmp.ne.s32.totalorder %s53, %s54
      %p63 = scmp.eq.s32.totalorder %s22, 0
      %p64 = por %p62, %p63
      %p65 = scmp.ne.s32.totalorder %s53, %s54
      %p66 = scmp.eq.s32.totalorder %s23, 1
      %p67 = por %p65, %p66
      %p69 = scmp.ne.s32.totalorder %s54, %s68
      %p70 = scmp.eq.s32.totalorder %s23, 0
      %p71 = por %p69, %p70
      %s73 = sadd.s32 %s72, 1
      %p76 = scmp.eq.s32.totalorder %s17, 1
      %p77 = scmp.ne.s32.totalorder %s72, %s74
      %p78 = scmp.eq.s32.totalorder %s17, 0
      %p79 = por %p77, %p78
      %p80 = scmp.ne.s32.totalorder %s72, %s74
      %p81 = scmp.eq.s32.totalorder %s22, 1
      %p82 = por %p80, %p81
      %p83 = scmp.ne.s32.totalorder %s74, %s75
      %p84 = scmp.eq.s32.totalorder %s22, 0
      %p85 = por %p83, %p84
      %p86 = scmp.ne.s32.totalorder %s74, %s75
      %p87 = scmp.eq.s32.totalorder %s23, 1
      %p88 = por %p86, %p87
      %p90 = scmp.ne.s32.totalorder %s75, %s89
      %p91 = scmp.eq.s32.totalorder %s23, 0
      %p92 = por %p90, %p91
      %s94 = sadd.s32 %s93, 1
      %p97 = scmp.eq.s32.totalorder %s17, 1
      %p98 = scmp.ne.s32.totalorder %s93, %s95
      %p99 = scmp.eq.s32.totalorder %s17, 0
      %p100 = por %p98, %p99
      %p101 = scmp.ne.s32.totalorder %s93, %s95
      %p102 = scmp.eq.s32.totalorder %s22, 1
      %p103 = por %p101, %p102
      %p104 = scmp.ne.s32.totalorder %s95, %s96
      %p105 = scmp.eq.s32.totalorder %s22, 0
      %p106 = por %p104, %p105
      %p107 = scmp.ne.s32.totalorder %s95, %s96
      %p108 = scmp.eq.s32.totalorder %s23, 1
      %p109 = por %p107, %p108
      %p111 = scmp.ne.s32.totalorder %s96, %s110
      %p112 = scmp.eq.s32.totalorder %s23, 0
      %p113 = por %p111, %p112
      %s115 = sadd.s32 %s114, 1
      %p118 = scmp.eq.s32.totalorder %s17, 1
      %p119 = scmp.ne.s32.totalorder %s114, %s116
      %p120 = scmp.eq.s32.totalorder %s17, 0
      %p121 = por %p119, %p120
      %p122 = scmp.ne.s32.totalorder %s114, %s116
      %p123 = scmp.eq.s32.totalorder %s22, 1
      %p124 = por %p122, %p123
      %p125 = scmp.ne.s32.totalorder %s116, %s117
      %p126 = scmp.eq.s32.totalorder %s22, 0
      %p127 = por %p125, %p126
      %p128 = scmp.ne.s32.totalorder %s116, %s117
      %p129 = scmp.eq.s32.totalorder %s23, 1
      %p130 = por %p128, %p129
      %p132 = scmp.ne.s32.totalorder %s117, %s131
      %p133 = scmp.eq.s32.totalorder %s23, 0
      %p134 = por %p132, %p133
      %s135 = ssub.s32 %s17, %s24
      %p136 = scmp.eq.s32.totalorder %s135, 0
      %s138 = sadd.s32 %s137, 1
      %s139 = scalar_select %p136, %s137, %s138
      %p142 = pneg %p136
      %p143 = scmp.eq.s32.totalorder %s17, 1
      %p144 = por %p142, %p143
      %p145 = scmp.ne.s32.totalorder %s137, %s140
      %p146 = scmp.eq.s32.totalorder %s17, 0
      %p147 = por %p145, %p146
      %p148 = scmp.ne.s32.totalorder %s137, %s140
      %p149 = scmp.eq.s32.totalorder %s22, 1
      %p150 = por %p148, %p149
      %p151 = scmp.ne.s32.totalorder %s140, %s141
      %p152 = scmp.eq.s32.totalorder %s22, 0
      %p153 = por %p151, %p152
      %p154 = scmp.ne.s32.totalorder %s140, %s141
      %p155 = scmp.eq.s32.totalorder %s23, 1
      %p156 = por %p154, %p155
      %p158 = scmp.ne.s32.totalorder %s141, %s157
      %p159 = scmp.eq.s32.totalorder %s23, 0
      %p160 = por %p158, %p159
      %p161 = scmp.le.s32.totalorder 1, %s17
      %p162 = scmp.lt.s32.totalorder %s17, 3
      %p163 = pnand %p161, %p162
      %p164 = pneg %p163
      // Predicated region
      $region9: #{_gated_attention_impl.1} parent=5 // pred_check
        _
      $region10: #{_gated_attention_impl.1} parent=5 // pred_check_branch
        %166 = sbr.rel (%p163) target = $region12
      $region11: #{_gated_attention_impl.1} parent=5 // pred_region
        %s167 = ssub.s32 %s17, 1
        // Predicated region
        $region13: #{_gated_attention_impl.1} parent=11 // pred_check
          %p168 = pneg %p64
        $region14: #{_gated_attention_impl.1} parent=11 // pred_check_branch
          %170 = sbr.rel (%p168) target = $region16
        $region15: #{_gated_attention_impl.1} parent=11 // pred_region
          %172 = vsyncadd [#allocation6], 0
          %s173 = sshll.u32 %s1, 4
          %s174 = int_to_ptr.hbm [resolvable:$true] %s173
          %s175 = sshll.u32 [#allocation5], 4
          %s176 = int_to_ptr.vmem [resolvable:$true] %s175
          %181 = dma.hbm_to_vmem [thread:$0]  %s174, 4096, %s176, [#allocation6], 256, 256, 16
        $region16: #{_gated_attention_impl.1} parent=11 // pred_fallthru
          _
        // Predicated region
        $region17: #{_gated_attention_impl.1} parent=11 // pred_check
          %p182 = pneg %p85
        $region18: #{_gated_attention_impl.1} parent=11 // pred_check_branch
          %184 = sbr.rel (%p182) target = $region20
        $region19: #{_gated_attention_impl.1} parent=11 // pred_region
          _
        $region20: #{_gated_attention_impl.1} parent=11 // pred_fallthru
          _
        // Predicated region
        $region21: #{_gated_attention_impl.1} parent=11 // pred_check
          %p185 = pneg %p106
        $region22: #{_gated_attention_impl.1} parent=11 // pred_check_branch
          %187 = sbr.rel (%p185) target = $region24
        $region23: #{_gated_attention_impl.1} parent=11 // pred_region
          _
        $region24: #{_gated_attention_impl.1} parent=11 // pred_fallthru
          _
        // Predicated region
        $region25: #{_gated_attention_impl.1} parent=11 // pred_check
          %p188 = pneg %p127
        $region26: #{_gated_attention_impl.1} parent=11 // pred_check_branch
          %190 = sbr.rel (%p188) target = $region28
        $region27: #{_gated_attention_impl.1} parent=11 // pred_region
          _
        $region28: #{_gated_attention_impl.1} parent=11 // pred_fallthru
          _
      $region12: #{_gated_attention_impl.1} parent=5 // pred_fallthru
        _
      %p191 = scmp.lt.s32.totalorder %s17, 2
      // Predicated region
      $region29: #{_gated_attention_impl.1} parent=5 // pred_check
        %p192 = pneg %p191
      $region30: #{_gated_attention_impl.1} parent=5 // pred_check_branch
        %194 = sbr.rel (%p192) target = $region32
      $region31: #{_gated_attention_impl.1} parent=5 // pred_region
        // Predicated region
        $region33: #{_gated_attention_impl.1} parent=31 // pred_check
          %p195 = pneg %p37
        $region34: #{_gated_attention_impl.1} parent=31 // pred_check_branch
          %197 = sbr.rel (%p195) target = $region36
        $region35: #{_gated_attention_impl.1} parent=31 // pred_region
          %s198 = sand.u32 %s27, 1
          %s199 = scalar_lea.sflag [#allocation4], %s198
          %s200 = sand.u32 %s27, 1
          %s201 = smul.addr %s200, 128
          %s202 = scalar_lea.vmem [#allocation3], %s201
          %s203 = smul.u32 16, %s17
          %205 = vsyncadd %s199, 0
          %s206 = smul.addr %s203, 8
          %s207 = scalar_lea.hbm %s0, %s206
          %s208 = sshll.u32 %s207, 4
          %s209 = int_to_ptr.hbm [resolvable:$true] %s208
          %s210 = sshll.u32 %s202, 4
          %s211 = int_to_ptr.vmem [resolvable:$true] %s210
          %216 = dma.hbm_to_vmem [thread:$0]  %s209, 2048, %s211, %s199, 128, 128, 8
        $region36: #{_gated_attention_impl.1} parent=31 // pred_fallthru
          _
      $region32: #{_gated_attention_impl.1} parent=5 // pred_fallthru
        _
      %p217 = scmp.le.s32.totalorder 1, %s17
      %p218 = scmp.lt.s32.totalorder %s17, 3
      %p219 = pnand %p217, %p218
      %p220 = pneg %p219
      // Predicated region
      $region37: #{_gated_attention_impl.1} parent=5 // pred_check
        _
      $region38: #{_gated_attention_impl.1} parent=5 // pred_check_branch
        %222 = sbr.rel (%p219) target = $region40
      $region39: #{_gated_attention_impl.1} parent=5 // pred_region
        %s223 = ssub.s32 %s17, 1
        %s224 = sand.u32 %s30, 1
        %s225 = scalar_lea.sflag [#allocation4], %s224
        %s226 = sand.u32 %s30, 1
        %s227 = smul.addr %s226, 128
        %s228 = scalar_lea.vmem [#allocation3], %s227
        // Predicated region
        $region41: #{_gated_attention_impl.1} parent=39 // pred_check
          %p229 = pneg %p43
        $region42: #{_gated_attention_impl.1} parent=39 // pred_check_branch
          %231 = sbr.rel (%p229) target = $region44
        $region43: #{_gated_attention_impl.1} parent=39 // pred_region
          %233 = dma.done %s225, 2048
        $region44: #{_gated_attention_impl.1} parent=39 // pred_fallthru
          _
        // Predicated region
        $region45: #{_gated_attention_impl.1} parent=39 // pred_check
          %p234 = pneg %p64
        $region46: #{_gated_attention_impl.1} parent=39 // pred_check_branch
          %236 = sbr.rel (%p234) target = $region48
        $region47: #{_gated_attention_impl.1} parent=39 // pred_region
          %238 = dma.done [#allocation6], 4096
        $region48: #{_gated_attention_impl.1} parent=39 // pred_fallthru
          _
        %s239 = sand.u32 %s30, 1
        %s240 = scalar_lea.sflag [#allocation4], %s239
        %s241 = sand.u32 %s30, 1
        %s242 = smul.addr %s241, 128
        %s243 = scalar_lea.vmem [#allocation3], %s242
        %p244 = pneg %p43
        %p245 = pneg %p40
        %p246 = pneg %p64
        %p247 = pneg %p61
        %p248 = pneg %p85
        %p249 = pneg %p82
        %p250 = pneg %p106
        %p251 = pneg %p103
        %p252 = pneg %p127
        %p253 = pneg %p124
        %p254 = pneg %p153
        %p255 = pneg %p150
        %s256 = smul.u32 16, %s22
        %p257 = scmp.lt.s32.totalorder %s256, 31
        %s258 = scalar_select %p257, %s256, 31
        %s259 = smul.addr %s258, 8
        %s260 = scalar_lea.vmem %s5, %s259
        %s261 = smul.u32 16, %s22
        %s262 = smul.u32 16, %s22
        %p263 = scmp.lt.s32.totalorder %s262, 31
        %s264 = scalar_select %p263, %s262, 31
        %s265 = smul.addr %s264, 8
        %s266 = scalar_lea.vmem %s5, %s265
        %s267 = smul.u32 16, %s22
        %v268 = vld [vmem:[%s228] sm:$0xff]
        %v269 = vld [vmem:[%s228 + $0x8] sm:$0xff]
        %v270 = vld [vmem:[%s228 + $0x10] sm:$0xff]
        %v271 = vld [vmem:[%s228 + $0x18] sm:$0xff]
        %v272 = vld [vmem:[%s228 + $0x20] sm:$0xff]
        %v273 = vld [vmem:[%s228 + $0x28] sm:$0xff]
        %v274 = vld [vmem:[%s228 + $0x30] sm:$0xff]
        %v275 = vld [vmem:[%s228 + $0x38] sm:$0xff]
        %v276 = vld [vmem:[%s228 + $0x40] sm:$0xff]
        %v277 = vld [vmem:[%s228 + $0x48] sm:$0xff]
        %v278 = vld [vmem:[%s228 + $0x50] sm:$0xff]
        %v279 = vld [vmem:[%s228 + $0x58] sm:$0xff]
        %v280 = vld [vmem:[%s228 + $0x60] sm:$0xff]
        %v281 = vld [vmem:[%s228 + $0x68] sm:$0xff]
        %v282 = vld [vmem:[%s228 + $0x70] sm:$0xff]
        %v283 = vld [vmem:[%s228 + $0x78] sm:$0xff]
        %v284 = vld [vmem:[#allocation5] sm:$0xff]
        %v285 = vld [vmem:[#allocation5 + $0x8] sm:$0xff]
        %v286 = vld [vmem:[#allocation5 + $0x10] sm:$0xff]
        %v287 = vld [vmem:[#allocation5 + $0x18] sm:$0xff]
        %v288 = vld [vmem:[#allocation5 + $0x20] sm:$0xff]
        %v289 = vld [vmem:[#allocation5 + $0x28] sm:$0xff]
        %v290 = vld [vmem:[#allocation5 + $0x30] sm:$0xff]
        %v291 = vld [vmem:[#allocation5 + $0x38] sm:$0xff]
        %v292 = vld [vmem:[#allocation5 + $0x40] sm:$0xff]
        %v293 = vld [vmem:[#allocation5 + $0x48] sm:$0xff]
        %v294 = vld [vmem:[#allocation5 + $0x50] sm:$0xff]
        %v295 = vld [vmem:[#allocation5 + $0x58] sm:$0xff]
        %v296 = vld [vmem:[#allocation5 + $0x60] sm:$0xff]
        %v297 = vld [vmem:[#allocation5 + $0x68] sm:$0xff]
        %v298 = vld [vmem:[#allocation5 + $0x70] sm:$0xff]
        %v299 = vld [vmem:[#allocation5 + $0x78] sm:$0xff]
        %v300 = vld [vmem:[#allocation5 + $0x80] sm:$0xff]
        %v301 = vld [vmem:[#allocation5 + $0x88] sm:$0xff]
        %v302 = vld [vmem:[#allocation5 + $0x90] sm:$0xff]
        %v303 = vld [vmem:[#allocation5 + $0x98] sm:$0xff]
        %v304 = vld [vmem:[#allocation5 + $0xa0] sm:$0xff]
        %v305 = vld [vmem:[#allocation5 + $0xa8] sm:$0xff]
        %v306 = vld [vmem:[#allocation5 + $0xb0] sm:$0xff]
        %v307 = vld [vmem:[#allocation5 + $0xb8] sm:$0xff]
        %v308 = vld [vmem:[#allocation5 + $0xc0] sm:$0xff]
        %v309 = vld [vmem:[#allocation5 + $0xc8] sm:$0xff]
        %v310 = vld [vmem:[#allocation5 + $0xd0] sm:$0xff]
        %v311 = vld [vmem:[#allocation5 + $0xd8] sm:$0xff]
        %v312 = vld [vmem:[#allocation5 + $0xe0] sm:$0xff]
        %v313 = vld [vmem:[#allocation5 + $0xe8] sm:$0xff]
        %v314 = vld [vmem:[#allocation5 + $0xf0] sm:$0xff]
        %v315 = vld [vmem:[#allocation5 + $0xf8] sm:$0xff]
        %v316 = vld [vmem:[%s2] sm:$0x3]
        %v318 = vperm.slane %v316, 0
        %v319 = vperm.slane %v316, 1
        %322 = vmatpush.msra.mxu0 %v314
        %323 = vmatpush.msra.mxu0 %v312
        %324 = vmatpush.msra.mxu0 %v310
        %325 = vmatpush.msra.mxu0 %v308
        %326 = vmatpush.msra.mxu0 %v306
        %327 = vmatpush.msra.mxu0 %v304
        %328 = vmatpush.msra.mxu0 %v302
        %329 = vmatpush.msra.mxu0 %v300
        %330 = vmatpush.msra.mxu0 %v298
        %331 = vmatpush.msra.mxu0 %v296
        %332 = vmatpush.msra.mxu0 %v294
        %333 = vmatpush.msra.mxu0 %v292
        %334 = vmatpush.msra.mxu0 %v290
        %335 = vmatpush.msra.mxu0 %v288
        %336 = vmatpush.msra.mxu0 %v286
        %337 = vmatpush.msra.mxu0 %v284
        %338 = vmatmul.f32.gmra.mxu0 %v268
        %v339 = vpop.f32.mrf.mxu0
        %v340 = vadd.f32 %v318, %v339
        %341 = vmatmul.f32.gmra.mxu0 %v269
        %v342 = vpop.f32.mrf.mxu0
        %v343 = vadd.f32 %v318, %v342
        %344 = vmatmul.f32.gmra.mxu0 %v270
        %v345 = vpop.f32.mrf.mxu0
        %v346 = vadd.f32 %v318, %v345
        %347 = vmatmul.f32.gmra.mxu0 %v271
        %v348 = vpop.f32.mrf.mxu0
        %v349 = vadd.f32 %v318, %v348
        %350 = vmatmul.f32.gmra.mxu0 %v272
        %v351 = vpop.f32.mrf.mxu0
        %v352 = vadd.f32 %v318, %v351
        %353 = vmatmul.f32.gmra.mxu0 %v273
        %v354 = vpop.f32.mrf.mxu0
        %v355 = vadd.f32 %v318, %v354
        %356 = vmatmul.f32.gmra.mxu0 %v274
        %v357 = vpop.f32.mrf.mxu0
        %v358 = vadd.f32 %v318, %v357
        %359 = vmatmul.f32.gmra.mxu0 %v275
        %v360 = vpop.f32.mrf.mxu0
        %v361 = vadd.f32 %v318, %v360
        %362 = vmatmul.f32.gmra.mxu0 %v276
        %v363 = vpop.f32.mrf.mxu0
        %v364 = vadd.f32 %v318, %v363
        %365 = vmatmul.f32.gmra.mxu0 %v277
        %v366 = vpop.f32.mrf.mxu0
        %v367 = vadd.f32 %v318, %v366
        %368 = vmatmul.f32.gmra.mxu0 %v278
        %v369 = vpop.f32.mrf.mxu0
        %v370 = vadd.f32 %v318, %v369
        %371 = vmatmul.f32.gmra.mxu0 %v279
        %v372 = vpop.f32.mrf.mxu0
        %v373 = vadd.f32 %v318, %v372
        %374 = vmatmul.f32.gmra.mxu0 %v280
        %v375 = vpop.f32.mrf.mxu0
        %v376 = vadd.f32 %v318, %v375
        %377 = vmatmul.f32.gmra.mxu0 %v281
        %v378 = vpop.f32.mrf.mxu0
        %v379 = vadd.f32 %v318, %v378
        %380 = vmatmul.f32.gmra.mxu0 %v282
        %v381 = vpop.f32.mrf.mxu0
        %v382 = vadd.f32 %v318, %v381
        %383 = vmatmul.f32.gmra.mxu0 %v283
        %v384 = vpop.f32.mrf.mxu0
        %v385 = vadd.f32 %v318, %v384
        %386 = vdwg.mxu0
        %387 = vmatpush.msra.mxu0 %v315
        %388 = vmatpush.msra.mxu0 %v313
        %389 = vmatpush.msra.mxu0 %v311
        %390 = vmatpush.msra.mxu0 %v309
        %391 = vmatpush.msra.mxu0 %v307
        %392 = vmatpush.msra.mxu0 %v305
        %393 = vmatpush.msra.mxu0 %v303
        %394 = vmatpush.msra.mxu0 %v301
        %395 = vmatpush.msra.mxu0 %v299
        %396 = vmatpush.msra.mxu0 %v297
        %397 = vmatpush.msra.mxu0 %v295
        %398 = vmatpush.msra.mxu0 %v293
        %399 = vmatpush.msra.mxu0 %v291
        %400 = vmatpush.msra.mxu0 %v289
        %401 = vmatpush.msra.mxu0 %v287
        %402 = vmatpush.msra.mxu0 %v285
        %403 = vmatmul.f32.gmra.mxu0 %v268
        %v404 = vpop.f32.mrf.mxu0
        %v405 = vadd.f32 %v319, %v404
        %406 = vmatmul.f32.gmra.mxu0 %v269
        %v407 = vpop.f32.mrf.mxu0
        %v408 = vadd.f32 %v319, %v407
        %409 = vmatmul.f32.gmra.mxu0 %v270
        %v410 = vpop.f32.mrf.mxu0
        %v411 = vadd.f32 %v319, %v410
        %412 = vmatmul.f32.gmra.mxu0 %v271
        %v413 = vpop.f32.mrf.mxu0
        %v414 = vadd.f32 %v319, %v413
        %415 = vmatmul.f32.gmra.mxu0 %v272
        %v416 = vpop.f32.mrf.mxu0
        %v417 = vadd.f32 %v319, %v416
        %418 = vmatmul.f32.gmra.mxu0 %v273
        %v419 = vpop.f32.mrf.mxu0
        %v420 = vadd.f32 %v319, %v419
        %421 = vmatmul.f32.gmra.mxu0 %v274
        %v422 = vpop.f32.mrf.mxu0
        %v423 = vadd.f32 %v319, %v422
        %424 = vmatmul.f32.gmra.mxu0 %v275
        %v425 = vpop.f32.mrf.mxu0
        %v426 = vadd.f32 %v319, %v425
        %427 = vmatmul.f32.gmra.mxu0 %v276
        %v428 = vpop.f32.mrf.mxu0
        %v429 = vadd.f32 %v319, %v428
        %430 = vmatmul.f32.gmra.mxu0 %v277
        %v431 = vpop.f32.mrf.mxu0
        %v432 = vadd.f32 %v319, %v431
        %433 = vmatmul.f32.gmra.mxu0 %v278
        %v434 = vpop.f32.mrf.mxu0
        %v435 = vadd.f32 %v319, %v434
        %436 = vmatmul.f32.gmra.mxu0 %v279
        %v437 = vpop.f32.mrf.mxu0
        %v438 = vadd.f32 %v319, %v437
        %439 = vmatmul.f32.gmra.mxu0 %v280
        %v440 = vpop.f32.mrf.mxu0
        %v441 = vadd.f32 %v319, %v440
        %442 = vmatmul.f32.gmra.mxu0 %v281
        %v443 = vpop.f32.mrf.mxu0
        %v444 = vadd.f32 %v319, %v443
        %445 = vmatmul.f32.gmra.mxu0 %v282
        %v446 = vpop.f32.mrf.mxu0
        %v447 = vadd.f32 %v319, %v446
        %448 = vmatmul.f32.gmra.mxu0 %v283
        %v449 = vpop.f32.mrf.mxu0
        %v450 = vadd.f32 %v319, %v449
        %451 = vdwg.mxu0
        %v452 = vtanh.pop %v340
        %v453 = vtanh.pop %v343
        %v454 = vtanh.pop %v346
        %v455 = vtanh.pop %v349
        %v456 = vtanh.pop %v352
        %v457 = vtanh.pop %v355
        %v458 = vtanh.pop %v358
        %v459 = vtanh.pop %v361
        %v460 = vtanh.pop %v364
        %v461 = vtanh.pop %v367
        %v462 = vtanh.pop %v370
        %v463 = vtanh.pop %v373
        %v464 = vtanh.pop %v376
        %v465 = vtanh.pop %v379
        %v466 = vtanh.pop %v382
        %v467 = vtanh.pop %v385
        %v468 = vmul.f32 %v405, 0.5
        %v469 = vmul.f32 %v408, 0.5
        %v470 = vmul.f32 %v411, 0.5
        %v471 = vmul.f32 %v414, 0.5
        %v472 = vmul.f32 %v417, 0.5
        %v473 = vmul.f32 %v420, 0.5
        %v474 = vmul.f32 %v423, 0.5
        %v475 = vmul.f32 %v426, 0.5
        %v476 = vmul.f32 %v429, 0.5
        %v477 = vmul.f32 %v432, 0.5
        %v478 = vmul.f32 %v435, 0.5
        %v479 = vmul.f32 %v438, 0.5
        %v480 = vmul.f32 %v441, 0.5
        %v481 = vmul.f32 %v444, 0.5
        %v482 = vmul.f32 %v447, 0.5
        %v483 = vmul.f32 %v450, 0.5
        %v484 = vtanh.pop %v468
        %v485 = vtanh.pop %v469
        %v486 = vtanh.pop %v470
        %v487 = vtanh.pop %v471
        %v488 = vtanh.pop %v472
        %v489 = vtanh.pop %v473
        %v490 = vtanh.pop %v474
        %v491 = vtanh.pop %v475
        %v492 = vtanh.pop %v476
        %v493 = vtanh.pop %v477
        %v494 = vtanh.pop %v478
        %v495 = vtanh.pop %v479
        %v496 = vtanh.pop %v480
        %v497 = vtanh.pop %v481
        %v498 = vtanh.pop %v482
        %v499 = vtanh.pop %v483
        %v500 = vadd.f32 %v484, 1.0
        %v501 = vadd.f32 %v485, 1.0
        %v502 = vadd.f32 %v486, 1.0
        %v503 = vadd.f32 %v487, 1.0
        %v504 = vadd.f32 %v488, 1.0
        %v505 = vadd.f32 %v489, 1.0
        %v506 = vadd.f32 %v490, 1.0
        %v507 = vadd.f32 %v491, 1.0
        %v508 = vadd.f32 %v492, 1.0
        %v509 = vadd.f32 %v493, 1.0
        %v510 = vadd.f32 %v494, 1.0
        %v511 = vadd.f32 %v495, 1.0
        %v512 = vadd.f32 %v496, 1.0
        %v513 = vadd.f32 %v497, 1.0
        %v514 = vadd.f32 %v498, 1.0
        %v515 = vadd.f32 %v499, 1.0
        %v516 = vmul.f32 %v500, 0.5
        %v517 = vmul.f32 %v501, 0.5
        %v518 = vmul.f32 %v502, 0.5
        %v519 = vmul.f32 %v503, 0.5
        %v520 = vmul.f32 %v504, 0.5
        %v521 = vmul.f32 %v505, 0.5
        %v522 = vmul.f32 %v506, 0.5
        %v523 = vmul.f32 %v507, 0.5
        %v524 = vmul.f32 %v508, 0.5
        %v525 = vmul.f32 %v509, 0.5
        %v526 = vmul.f32 %v510, 0.5
        %v527 = vmul.f32 %v511, 0.5
        %v528 = vmul.f32 %v512, 0.5
        %v529 = vmul.f32 %v513, 0.5
        %v530 = vmul.f32 %v514, 0.5
        %v531 = vmul.f32 %v515, 0.5
        %v532 = vmul.f32 %v452, %v516
        %v533 = vmul.f32 %v453, %v517
        %v534 = vmul.f32 %v454, %v518
        %v535 = vmul.f32 %v455, %v519
        %v536 = vmul.f32 %v456, %v520
        %v537 = vmul.f32 %v457, %v521
        %v538 = vmul.f32 %v458, %v522
        %v539 = vmul.f32 %v459, %v523
        %v540 = vmul.f32 %v460, %v524
        %v541 = vmul.f32 %v461, %v525
        %v542 = vmul.f32 %v462, %v526
        %v543 = vmul.f32 %v463, %v527
        %v544 = vmul.f32 %v464, %v528
        %v545 = vmul.f32 %v465, %v529
        %v546 = vmul.f32 %v466, %v530
        %v547 = vmul.f32 %v467, %v531
        %v548 = vld [vmem:[%s3] sm:$0xff]
        %v549 = vld [vmem:[%s3 + $0x8] sm:$0xff]
        %v550 = vld [vmem:[%s3 + $0x10] sm:$0xff]
        %v551 = vld [vmem:[%s3 + $0x18] sm:$0xff]
        %v552 = vld [vmem:[%s3 + $0x20] sm:$0xff]
        %v553 = vld [vmem:[%s3 + $0x28] sm:$0xff]
        %v554 = vld [vmem:[%s3 + $0x30] sm:$0xff]
        %v555 = vld [vmem:[%s3 + $0x38] sm:$0xff]
        %v556 = vld [vmem:[%s3 + $0x40] sm:$0xff]
        %v557 = vld [vmem:[%s3 + $0x48] sm:$0xff]
        %v558 = vld [vmem:[%s3 + $0x50] sm:$0xff]
        %v559 = vld [vmem:[%s3 + $0x58] sm:$0xff]
        %v560 = vld [vmem:[%s3 + $0x60] sm:$0xff]
        %v561 = vld [vmem:[%s3 + $0x68] sm:$0xff]
        %v562 = vld [vmem:[%s3 + $0x70] sm:$0xff]
        %v563 = vld [vmem:[%s3 + $0x78] sm:$0xff]
        %v564 = vld [vmem:[#allocation2] sm:$0x1]
        %v566 = vperm.slane %v564, 0
        %568 = vmatpush.msra.mxu0 %v563
        %569 = vmatpush.msra.mxu0 %v562
        %570 = vmatpush.msra.mxu0 %v561
        %571 = vmatpush.msra.mxu0 %v560
        %572 = vmatpush.msra.mxu0 %v559
        %573 = vmatpush.msra.mxu0 %v558
        %574 = vmatpush.msra.mxu0 %v557
        %575 = vmatpush.msra.mxu0 %v556
        %576 = vmatpush.msra.mxu0 %v555
        %577 = vmatpush.msra.mxu0 %v554
        %578 = vmatpush.msra.mxu0 %v553
        %579 = vmatpush.msra.mxu0 %v552
        %580 = vmatpush.msra.mxu0 %v551
        %581 = vmatpush.msra.mxu0 %v550
        %582 = vmatpush.msra.mxu0 %v549
        %583 = vmatpush.msra.mxu0 %v548
        %584 = vmatmul.f32.gmra.mxu0 %v532
        %v585 = vpop.f32.mrf.mxu0
        %v586 = vadd.f32 %v566, %v585
        %587 = vmatmul.f32.gmra.mxu0 %v533
        %v588 = vpop.f32.mrf.mxu0
        %v589 = vadd.f32 %v566, %v588
        %590 = vmatmul.f32.gmra.mxu0 %v534
        %v591 = vpop.f32.mrf.mxu0
        %v592 = vadd.f32 %v566, %v591
        %593 = vmatmul.f32.gmra.mxu0 %v535
        %v594 = vpop.f32.mrf.mxu0
        %v595 = vadd.f32 %v566, %v594
        %596 = vmatmul.f32.gmra.mxu0 %v536
        %v597 = vpop.f32.mrf.mxu0
        %v598 = vadd.f32 %v566, %v597
        %599 = vmatmul.f32.gmra.mxu0 %v537
        %v600 = vpop.f32.mrf.mxu0
        %v601 = vadd.f32 %v566, %v600
        %602 = vmatmul.f32.gmra.mxu0 %v538
        %v603 = vpop.f32.mrf.mxu0
        %v604 = vadd.f32 %v566, %v603
        %605 = vmatmul.f32.gmra.mxu0 %v539
        %v606 = vpop.f32.mrf.mxu0
        %v607 = vadd.f32 %v566, %v606
        %608 = vmatmul.f32.gmra.mxu0 %v540
        %v609 = vpop.f32.mrf.mxu0
        %v610 = vadd.f32 %v566, %v609
        %611 = vmatmul.f32.gmra.mxu0 %v541
        %v612 = vpop.f32.mrf.mxu0
        %v613 = vadd.f32 %v566, %v612
        %614 = vmatmul.f32.gmra.mxu0 %v542
        %v615 = vpop.f32.mrf.mxu0
        %v616 = vadd.f32 %v566, %v615
        %617 = vmatmul.f32.gmra.mxu0 %v543
        %v618 = vpop.f32.mrf.mxu0
        %v619 = vadd.f32 %v566, %v618
        %620 = vmatmul.f32.gmra.mxu0 %v544
        %v621 = vpop.f32.mrf.mxu0
        %v622 = vadd.f32 %v566, %v621
        %623 = vmatmul.f32.gmra.mxu0 %v545
        %v624 = vpop.f32.mrf.mxu0
        %v625 = vadd.f32 %v566, %v624
        %626 = vmatmul.f32.gmra.mxu0 %v546
        %v627 = vpop.f32.mrf.mxu0
        %v628 = vadd.f32 %v566, %v627
        %629 = vmatmul.f32.gmra.mxu0 %v547
        %v630 = vpop.f32.mrf.mxu0
        %v631 = vadd.f32 %v566, %v630
        %632 = vdwg.mxu0
        %vm633 = vcmask 7168
        %634 = vst.msk [vmem:[%s266] sm:$0xff] %vm633, %v586
        %635 = vst.msk [vmem:[%s266 + $0x8] sm:$0xff] %vm633, %v589
        %636 = vst.msk [vmem:[%s266 + $0x10] sm:$0xff] %vm633, %v592
        %637 = vst.msk [vmem:[%s266 + $0x18] sm:$0xff] %vm633, %v595
        %638 = vst.msk [vmem:[%s266 + $0x20] sm:$0xff] %vm633, %v598
        %639 = vst.msk [vmem:[%s266 + $0x28] sm:$0xff] %vm633, %v601
        %640 = vst.msk [vmem:[%s266 + $0x30] sm:$0xff] %vm633, %v604
        %641 = vst.msk [vmem:[%s266 + $0x38] sm:$0xff] %vm633, %v607
        %642 = vst.msk [vmem:[%s266 + $0x40] sm:$0xff] %vm633, %v610
        %643 = vst.msk [vmem:[%s266 + $0x48] sm:$0xff] %vm633, %v613
        %644 = vst.msk [vmem:[%s266 + $0x50] sm:$0xff] %vm633, %v616
        %645 = vst.msk [vmem:[%s266 + $0x58] sm:$0xff] %vm633, %v619
        %646 = vst.msk [vmem:[%s266 + $0x60] sm:$0xff] %vm633, %v622
        %647 = vst.msk [vmem:[%s266 + $0x68] sm:$0xff] %vm633, %v625
        %648 = vst.msk [vmem:[%s266 + $0x70] sm:$0xff] %vm633, %v628
        %649 = vst.msk [vmem:[%s266 + $0x78] sm:$0xff] %vm633, %v631
        %s650 = smul.u32 16, %s22
        %p651 = scmp.lt.s32.totalorder %s650, 31
        %s652 = scalar_select %p651, %s650, 31
        %s653 = smul.addr %s652, 8
        %s654 = scalar_lea.vmem %s5, %s653
        // Predicated region
        $region49: #{_gated_attention_impl.1} parent=39 // pred_check
          %p655 = pneg %p150
        $region50: #{_gated_attention_impl.1} parent=39 // pred_check_branch
          %657 = sbr.rel (%p655) target = $region52
        $region51: #{_gated_attention_impl.1} parent=39 // pred_region
          %s658 = smul.u32 16, %s22
        $region52: #{_gated_attention_impl.1} parent=39 // pred_fallthru
          _
      $region40: #{_gated_attention_impl.1} parent=5 // pred_fallthru
        _
      %p659 = scmp.le.s32.totalorder 2, %s17
      // Predicated region
      $region53: #{_gated_attention_impl.1} parent=5 // pred_check
        %p660 = pneg %p659
      $region54: #{_gated_attention_impl.1} parent=5 // pred_check_branch
        %662 = sbr.rel (%p660) target = $region56
      $region55: #{_gated_attention_impl.1} parent=5 // pred_region
        %s663 = ssub.s32 %s17, 2
        // Predicated region
        $region57: #{_gated_attention_impl.1} parent=55 // pred_check
          %p664 = pneg %p156
        $region58: #{_gated_attention_impl.1} parent=55 // pred_check_branch
          %666 = sbr.rel (%p664) target = $region60
        $region59: #{_gated_attention_impl.1} parent=55 // pred_region
          %s667 = smul.u32 16, %s23
          %p668 = scmp.lt.s32.totalorder %s667, 31
          %s669 = scalar_select %p668, %s667, 31
          %s670 = smul.addr %s669, 8
          %s671 = scalar_lea.vmem %s5, %s670
        $region60: #{_gated_attention_impl.1} parent=55 // pred_fallthru
          _
      $region56: #{_gated_attention_impl.1} parent=5 // pred_fallthru
        _
    $region6: #{_gated_attention_impl.1} parent=1 // loop_footer
      %s21 = sadd.s32 1, %s17
    $region7: #{_gated_attention_impl.1} parent=1 // loop_footer_branch
      %16 = sbr.rel target = $region3
    $region8: #{_gated_attention_impl.1} parent=1 // loop_exit
      _
    %672 = vsyncpa [#allocation4], 1
    %s673 = scalar_lea.sflag [#allocation4], 1
    %674 = vsyncpa %s673, 1
    %675 = vsyncpa [#allocation6], 1

</llo_original>
